<compile_context>
chip_gen: v7x
topology: tpu7x:2x2x1
jax: 0.10.0
libtpu: 0.0.40
codegen_flags: <defaults>
</compile_context>

<pallas_src>
import numpy as np
import jax
import jax.numpy as jnp
from jax.experimental import pallas as pl
from jax.experimental.pallas import tpu as pltpu

# ----------------------------------------------------------------------------
# Static O(3) metadata (mirrors mini2d_o3(metadata, n_channels) construction).
# ----------------------------------------------------------------------------
L_LIST = (0, 0, 1, 1)          # angular momentum per irrep slot
P_LIST = (1, -1, 1, -1)        # parity per irrep slot
METADATA = (8, 4, 4, 4)        # channel multiplicities
N_CHANNELS = sum(METADATA)     # 20
STRIDE = 4                     # fold(stride=4) / two-body feature width


def rep_offsets(meta):
    offs, o = [], 0
    for l, n in zip(L_LIST, meta):
        offs.append(o)
        o += (2 * l + 1) * n
    return tuple(offs), o


IN_OFF, D_REP = rep_offsets(METADATA)      # D_REP = 36
M_FOLD = D_REP // STRIDE                   # 9
D_TWO = M_FOLD * M_FOLD * STRIDE           # 324 valid twobody lanes
LANE = 128
D_TWO_PAD = 3 * LANE                       # 384 lane-dense padded twobody width
T_PAD = 2 * LANE                           # 256 >= 172 CGP product terms


def build_cgp_paths(meta):
    """Channel-wise CG coupling paths (i1 <= i2), output l truncated to input lmax,
    output parity = p1*p2.  Returns (paths, metadata_out)."""
    lmax = max(L_LIST)
    irrep_index = {(l, p): k for k, (l, p) in enumerate(zip(L_LIST, P_LIST))}
    out_counts = [0] * len(meta)
    paths = []
    for i1 in range(len(meta)):
        for i2 in range(i1, len(meta)):
            n = min(meta[i1], meta[i2])
            if n == 0:
                continue
            l1, l2 = L_LIST[i1], L_LIST[i2]
            p_out = P_LIST[i1] * P_LIST[i2]
            for lo in range(abs(l1 - l2), min(l1 + l2, lmax) + 1):
                j = irrep_index[(lo, p_out)]
                paths.append((i1, i2, lo, j, out_counts[j], n))
                out_counts[j] += n
    return tuple(paths), tuple(out_counts)


# TODO(synk): torch_gauge's CGPCoupler exact output-path ordering / overlap_out
# bookkeeping is not reproduced bit-for-bit; this is an equivalent equivariant
# channel-wise coupler followed by an IELin back to `metadata`.
CGP_PATHS, CGP_META = build_cgp_paths(METADATA)   # CGP_META = (20, 8, 16, 12)
CGP_OFF, D_CGP = rep_offsets(CGP_META)            # D_CGP = 112


def _cg_product_terms(l1, l2, lo):
    """Decompose the real-basis CG coupling (l <= 1, Cartesian) into product terms
    (m1, m2, m_out, coeff) so the whole coupler becomes gather-matmuls.
    TODO(synk): torch_gauge uses real-spherical-harmonic CG phases; signs/order of
    m-components may differ (weights here are synthetic anyway)."""
    if (l1, l2, lo) == (0, 0, 0):
        return [(0, 0, 0, 1.0)]
    if (l1, l2, lo) == (0, 1, 1):
        return [(0, m, m, 1.0) for m in range(3)]
    if (l1, l2, lo) == (1, 1, 0):
        c = float(1.0 / np.sqrt(3.0))
        return [(m, m, 0, c) for m in range(3)]
    if (l1, l2, lo) == (1, 1, 1):
        c = float(1.0 / np.sqrt(2.0))
        return [(1, 2, 0, c), (2, 1, 0, -c),
                (2, 0, 1, c), (0, 2, 1, -c),
                (0, 1, 2, c), (1, 0, 2, -c)]
    raise NotImplementedError((l1, l2, lo))


# ----------------------------------------------------------------------------
# Fused Pallas kernel
# ----------------------------------------------------------------------------
def mini2d_kernel(x1_ref, x2_ref, s_ref, aux20_ref, w1_ref, st_ref,
                  w2st_ref, b2st_ref, wie1_ref, cglr_ref, cgw_ref,
                  eij_ref, kswg_ref, bg_ref, ksumt_ref, croll_ref,
                  out1_ref, out2_ref):
    f32 = jnp.float32
    C = N_CHANNELS

    x = x1_ref[...]                                    # (B, 36)
    x2 = x2_ref[...]                                   # (B, 384), lanes >= 324 are zero

    smask = aux20_ref[0:1, :]                          # (1, 20) 1 on (l=0,+) channels
    rn_bias = aux20_ref[1:2, :]                        # (1, 20)
    b1 = aux20_ref[2:3, :]                             # (1, 20)

    # ---- RepNorm1d front-end: one matmul, no concat --------------------------
    norm2 = jnp.dot(x * x, s_ref[...], preferred_element_type=f32)    # (B, 20)
    norms = jnp.sqrt(norm2)
    # (l=0,+) channels coincide with rep lanes 0..7, so the raw scalars come
    # straight from x; everything else uses the per-channel norm.
    inv = smask * x[:, :C] + (1.0 - smask) * norms
    # TODO(synk): scale-only normalization with in-kernel batch statistics (training
    # mode); torch_gauge RepNorm1d running stats / exact bias parametrization not
    # replicated.  A batch-tiled grid must hoist these statistics out of the kernel.
    mean = jnp.mean(inv, axis=0, keepdims=True)
    var = jnp.mean((inv - mean) ** 2, axis=0, keepdims=True)
    n_inv = inv * jax.lax.rsqrt(var + 1e-2)                           # (B, 20)
    gscale = pl.reciprocal(norms + rn_bias, approx=False)             # exact (parity)

    # ---- gauge / CGP branch (independent of the MLP branch) ------------------
    g = x * jnp.dot(gscale, st_ref[...], preferred_element_type=f32)  # (B, 36)
    g1 = jnp.dot(g, wie1_ref[...], preferred_element_type=f32)        # IELin1 residual
    lr = jnp.dot(g, cglr_ref[...], preferred_element_type=f32)        # (B, 512) = [L|R]
    left = lr[:, :T_PAD]
    right = lr[:, T_PAD:]
    # CGP coupler + IELin2 folded into cgW (padded rows are zero).
    g2 = g1 + jnp.dot(left * right, cgw_ref[...], preferred_element_type=f32)  # (B,36)

    # ---- invariant MLP branch (w2 / b2 folded with the channel->rep expander) -
    h = jnp.dot(n_inv, w1_ref[...], preferred_element_type=f32) + b1
    h = h * pl.reciprocal(1.0 + jnp.exp(-h), approx=False)            # Swish
    n_rep = jnp.dot(h, w2st_ref[...], preferred_element_type=f32) + b2st_ref[...]

    # ---- scalar_mul gating: x_1d_new = g2 * expand(n) -------------------------
    x1_new = g2 * n_rep                                               # (B, 36)
    out1_ref[...] = x1_new

    # ---- twobody, lane-dense (B, 384) end to end ------------------------------
    # fold(stride=4) is a pure reshape; in the flat layout x1_new IS fold_1d.
    fij = jnp.dot(x1_new, eij_ref[...], preferred_element_type=f32)   # (B, 768)=[fi|fj]
    fi = fij[:, :D_TWO_PAD]                                           # f[b,i,k] bcast
    fj = fij[:, D_TWO_PAD:]                                           # f[b,j,k] bcast
    z = x2 * fi * fj
    hg = jnp.dot(z, kswg_ref[...], preferred_element_type=f32) + bg_ref[...]   # (B, 4)
    gate = hg * pl.reciprocal(1.0 + jnp.exp(-hg), approx=False)       # Swish gate
    gate_exp = jnp.dot(gate, ksumt_ref[...], preferred_element_type=f32)       # (B,384)

    # Block-diag 4x4 twobody linear: 7 lane-rotates + VPU fmas instead of the
    # nearly-empty (384,384) matmul.  croll[d+3, L] = wl[L%4-d, L%4] (0 outside).
    lin = croll_ref[3:4, :] * x2                                      # d = 0 term
    for d in (-3, -2, -1, 1, 2, 3):
        lin = lin + croll_ref[d + 3:d + 4, :] * pltpu.roll(
            x2, shift=d % D_TWO_PAD, axis=1)

    out2_ref[...] = lin * gate_exp                                    # unmasked vst


# ----------------------------------------------------------------------------
# pallas_call wrapper (single block, no grid — shapes tiny, everything in VMEM)
# ----------------------------------------------------------------------------
_PARAM_KEYS = ("S", "aux20", "w1", "St", "W2St", "B2St", "wie1",
               "cgLR", "cgW", "Eij", "KsWg", "bg", "KsumT", "croll")


def mini2d_o3_forward(x1d, x2d, params):
    B = x1d.shape[0]
    x2_pad = jnp.pad(x2d.reshape(B, D_TWO), ((0, 0), (0, D_TWO_PAD - D_TWO)))
    args = (x1d, x2_pad) + tuple(params[k] for k in _PARAM_KEYS)
    vmem = pltpu.MemorySpace.VMEM
    out1, out2_pad = pl.pallas_call(
        mini2d_kernel,
        out_shape=(jax.ShapeDtypeStruct((B, D_REP), jnp.float32),
                   jax.ShapeDtypeStruct((B, D_TWO_PAD), jnp.float32)),
        in_specs=[pl.BlockSpec(memory_space=vmem) for _ in args],
        out_specs=(pl.BlockSpec(memory_space=vmem),
                   pl.BlockSpec(memory_space=vmem)),
    )(*args)
    # TODO(synk): for large B add a batch-tiled grid with
    # dimension_semantics=("parallel",) (v7x second TensorCore) and hoist the
    # RepNorm batch statistics out of the kernel.
    return out1, out2_pad[:, :D_TWO].reshape(B, M_FOLD, M_FOLD, STRIDE)


# ----------------------------------------------------------------------------
# Deterministic parameter / structural-matrix construction (all done at init)
# ----------------------------------------------------------------------------
def build_structural_matrices():
    C = N_CHANNELS
    S = np.zeros((D_REP, C), np.float32)       # rep-position -> channel indicator
    St = np.zeros((C, D_REP), np.float32)      # channel -> rep-position expander
    smask = np.zeros((1, C), np.float32)
    chan_off, pos = 0, 0
    for l, p, n in zip(L_LIST, P_LIST, METADATA):
        for _m in range(2 * l + 1):
            for c in range(n):
                S[pos, chan_off + c] = 1.0
                St[chan_off + c, pos] = 1.0
                pos += 1
        if l == 0 and p == 1:
            smask[0, chan_off:chan_off + n] = 1.0
        chan_off += n
    return S, St, smask


def build_ielin_matrix(key, meta_in, meta_out):
    """Dense (D_in, D_out) matrix realizing IELin exactly: per-irrep channel mixing,
    same weight tied across all m components, zero elsewhere."""
    d_in = sum((2 * l + 1) * n for l, n in zip(L_LIST, meta_in))
    d_out = sum((2 * l + 1) * n for l, n in zip(L_LIST, meta_out))
    w_full = np.zeros((d_in, d_out), np.float32)
    off_in = off_out = 0
    for l, n_in, n_out in zip(L_LIST, meta_in, meta_out):
        dim = 2 * l + 1
        if n_in > 0 and n_out > 0:
            key, sub = jax.random.split(key)
            blk = np.asarray(jax.random.normal(sub, (n_in, n_out), jnp.float32))
            blk = blk / np.sqrt(n_in)
            for m in range(dim):
                w_full[off_in + m * n_in: off_in + (m + 1) * n_in,
                       off_out + m * n_out: off_out + (m + 1) * n_out] = blk
        off_in += dim * n_in
        off_out += dim * n_out
    return w_full


def build_cgp_gather_matrices(wie2):
    """Collapse the CGP coupler + IELin2 into gather matrices so that
    g2_delta = ((g1 @ L) * (g1 @ R)) @ W.  Returns L (36,T), R (36,T), W (T,36)."""
    terms = []
    for (i1, i2, lo, j_out, ch_off, w) in CGP_PATHS:
        l1, l2 = L_LIST[i1], L_LIST[i2]
        n1, n2 = METADATA[i1], METADATA[i2]
        off1, off2 = IN_OFF[i1], IN_OFF[i2]
        for (m1, m2, mo, coeff) in _cg_product_terms(l1, l2, lo):
            for c in range(w):
                left = off1 + m1 * n1 + c
                right = off2 + m2 * n2 + c
                dest = CGP_OFF[j_out] + mo * CGP_META[j_out] + ch_off + c
                terms.append((left, right, coeff, dest))
    T = len(terms)
    L = np.zeros((D_REP, T), np.float32)
    R = np.zeros((D_REP, T), np.float32)
    W = np.zeros((T, D_REP), np.float32)
    for t, (lc, rc, coeff, dr) in enumerate(terms):
        L[lc, t] = 1.0
        R[rc, t] = 1.0
        W[t, :] = np.float32(coeff) * wie2[dr, :]
    return L, R, W


def build_twobody_matrices():
    """Structural matrices on the padded (B, 384) slab:
       [fi|fj] = f @ [Ei|Ej], a = (x2*fi*fj) @ Ksum, gate_exp = gate @ Ksum.T."""
    Ei = np.zeros((D_REP, D_TWO_PAD), np.float32)
    Ej = np.zeros((D_REP, D_TWO_PAD), np.float32)
    Ks = np.zeros((D_TWO_PAD, STRIDE), np.float32)
    for i in range(M_FOLD):
        for j in range(M_FOLD):
            for k in range(STRIDE):
                col = i * M_FOLD * STRIDE + j * STRIDE + k
                Ei[i * STRIDE + k, col] = 1.0
                Ej[j * STRIDE + k, col] = 1.0
                Ks[col, k] = 1.0
    return Ei, Ej, Ks


def build_croll(wl):
    """Coefficient rows for the roll-based block-diag 4x4 linear:
       lin = sum_d croll[d+3] * roll(x2, d)   (jnp.roll semantics: y[i] = x[i-d])."""
    cr = np.zeros((7, D_TWO_PAD), np.float32)
    for col in range(D_TWO):
        k_out = col % STRIDE
        for d in range(-3, 4):
            k_in = k_out - d
            if 0 <= k_in < STRIDE:
                cr[d + 3, col] = wl[k_in, k_out]
    return cr


def init_params(key):
    C = N_CHANNELS
    ks = jax.random.split(key, 9)
    S, St, smask = build_structural_matrices()

    def lin(k, fan_in, shape):
        b = 1.0 / np.sqrt(fan_in)
        return np.asarray(jax.random.uniform(k, shape, jnp.float32, -b, b))

    w1 = lin(ks[0], C, (C, C)); b1 = lin(ks[1], C, (1, C))
    w2 = lin(ks[2], C, (C, C)); b2 = lin(ks[3], C, (1, C))
    wie1 = build_ielin_matrix(ks[4], METADATA, METADATA)          # (36, 36)
    wie2 = build_ielin_matrix(ks[5], CGP_META, METADATA)          # (112, 36)
    cgL, cgR, cgW = build_cgp_gather_matrices(wie2)               # (36,T),(36,T),(T,36)
    wg = lin(ks[6], STRIDE, (STRIDE, STRIDE)); bg = lin(ks[7], STRIDE, (1, STRIDE))
    wl = lin(ks[8], STRIDE, (STRIDE, STRIDE))                     # twobody_linear, no bias
    Ei, Ej, Ksum = build_twobody_matrices()
    rn_bias = np.full((1, C), 0.5, np.float32)

    # --- constant folding / merging (review items) ---
    T = cgL.shape[1]                                              # 172
    cgLR = np.zeros((D_REP, 2 * T_PAD), np.float32)               # [wie1@cgL | wie1@cgR]
    cgLR[:, :T] = wie1 @ cgL
    cgLR[:, T_PAD:T_PAD + T] = wie1 @ cgR
    cgWp = np.zeros((T_PAD, D_REP), np.float32)
    cgWp[:T, :] = cgW
    Eij = np.concatenate([Ei, Ej], axis=1)                        # (36, 768)
    KsWg = Ksum @ wg                                              # (384, 4)
    KsumT = np.ascontiguousarray(Ksum.T)                          # (4, 384)
    W2St = w2 @ St                                                # (20, 36)
    B2St = b2 @ St                                                # (1, 36)
    aux20 = np.concatenate([smask, rn_bias, b1], axis=0)          # (3, 20)
    croll = build_croll(wl)                                       # (7, 384)

    params = dict(S=S, aux20=aux20, w1=w1, St=St, W2St=W2St, B2St=B2St,
                  wie1=wie1, cgLR=cgLR, cgW=cgWp, Eij=Eij, KsWg=KsWg,
                  bg=bg, KsumT=KsumT, croll=croll)
    params = {k: jnp.asarray(v, jnp.float32) for k, v in params.items()}

    raw = dict(S=S, St=St, smask=smask, rn_bias=rn_bias, w1=w1, b1=b1, w2=w2, b2=b2,
               wie1=wie1, cgL=cgL, cgR=cgR, cgW=cgW, wg=wg, bg=bg, wl=wl)
    return params, raw


# ----------------------------------------------------------------------------
# Pure-numpy (float64) reference of the UNFUSED math — validates the constant
# folding, lane padding, merged matmuls and the roll-based block-diag linear.
# ----------------------------------------------------------------------------
def reference_forward_np(x1d, x2d, raw):
    r = {k: np.asarray(v, np.float64) for k, v in raw.items()}
    x = np.asarray(x1d, np.float64)
    x2 = np.asarray(x2d, np.float64)
    B = x.shape[0]
    C = N_CHANNELS

    norms = np.sqrt((x * x) @ r["S"])
    inv = r["smask"] * x[:, :C] + (1.0 - r["smask"]) * norms
    mean = inv.mean(0, keepdims=True)
    var = ((inv - mean) ** 2).mean(0, keepdims=True)
    n_inv = inv / np.sqrt(var + 1e-2)
    gscale = 1.0 / (norms + r["rn_bias"])

    g = x * (gscale @ r["St"])
    g1 = g @ r["wie1"]
    g2 = g1 + ((g1 @ r["cgL"]) * (g1 @ r["cgR"])) @ r["cgW"]

    h = n_inv @ r["w1"] + r["b1"]
    h = h / (1.0 + np.exp(-h))
    n_rep = (h @ r["w2"] + r["b2"]) @ r["St"]
    x1_new = g2 * n_rep

    f = x1_new.reshape(B, M_FOLD, STRIDE)
    a = np.einsum("bijk,bjk,bik->bk", x2, f, f)
    hg = a @ r["wg"] + r["bg"]
    gate = hg / (1.0 + np.exp(-hg))
    lin = np.einsum("bijk,kl->bijl", x2, r["wl"])
    x2_new = lin * gate[:, None, None, :]
    return x1_new.astype(np.float32), x2_new.astype(np.float32)


if __name__ == "__main__":
    key = jax.random.PRNGKey(0)
    k_p, k_x1, k_x2 = jax.random.split(key, 3)
    params, raw = init_params(k_p)

    B = 2
    x1d = jax.random.normal(k_x1, (B, D_REP), jnp.float32)                    # (2, 36)
    x2d = jax.random.normal(k_x2, (B, M_FOLD, M_FOLD, STRIDE), jnp.float32)   # (2, 9, 9, 4)

    fwd = jax.jit(mini2d_o3_forward)
    x1d_new, x2d_new = fwd(x1d, x2d, params)
    jax.block_until_ready((x1d_new, x2d_new))

    assert x1d_new.shape == (B, D_REP)
    assert x2d_new.shape == (B, M_FOLD, M_FOLD, STRIDE)
    assert bool(jnp.all(jnp.isfinite(x1d_new))) and bool(jnp.all(jnp.isfinite(x2d_new)))

    ref1, ref2 = reference_forward_np(np.asarray(x1d), np.asarray(x2d), raw)
    np.testing.assert_allclose(np.asarray(x1d_new), ref1, rtol=5e-2, atol=5e-2)
    np.testing.assert_allclose(np.asarray(x2d_new), ref2, rtol=5e-2, atol=5e-2)
    print("KERNEL_OK")
</pallas_src>

<mosaic_0001>
module attributes {stable_mosaic.version = 11 : i64} {
  func.func @mini2d_kernel(%arg0: memref<2x36xf32, #tpu.memory_space<vmem>>, %arg1: memref<2x384xf32, #tpu.memory_space<vmem>>, %arg2: memref<36x20xf32, #tpu.memory_space<vmem>>, %arg3: memref<3x20xf32, #tpu.memory_space<vmem>>, %arg4: memref<20x20xf32, #tpu.memory_space<vmem>>, %arg5: memref<20x36xf32, #tpu.memory_space<vmem>>, %arg6: memref<20x36xf32, #tpu.memory_space<vmem>>, %arg7: memref<1x36xf32, #tpu.memory_space<vmem>>, %arg8: memref<36x36xf32, #tpu.memory_space<vmem>>, %arg9: memref<36x512xf32, #tpu.memory_space<vmem>>, %arg10: memref<256x36xf32, #tpu.memory_space<vmem>>, %arg11: memref<36x768xf32, #tpu.memory_space<vmem>>, %arg12: memref<384x4xf32, #tpu.memory_space<vmem>>, %arg13: memref<1x4xf32, #tpu.memory_space<vmem>>, %arg14: memref<4x384xf32, #tpu.memory_space<vmem>>, %arg15: memref<7x384xf32, #tpu.memory_space<vmem>>, %arg16: memref<2x36xf32, #tpu.memory_space<vmem>>, %arg17: memref<2x384xf32, #tpu.memory_space<vmem>>) attributes {dimension_semantics = [], scalar_prefetch = 0 : i64, scratch_operands = 0 : i64, tpu.core_type = #tpu.core_type<tc>} {
    %c0 = arith.constant 0 : index
    %c0_0 = arith.constant 0 : index
    %0 = vector.load %arg0[%c0, %c0_0] : memref<2x36xf32, #tpu.memory_space<vmem>>, vector<2x36xf32>
    %c0_1 = arith.constant 0 : index
    %c0_2 = arith.constant 0 : index
    %1 = vector.load %arg1[%c0_1, %c0_2] : memref<2x384xf32, #tpu.memory_space<vmem>>, vector<2x384xf32>
    %c0_3 = arith.constant 0 : index
    %c0_4 = arith.constant 0 : index
    %2 = vector.load %arg3[%c0_3, %c0_4] : memref<3x20xf32, #tpu.memory_space<vmem>>, vector<1x20xf32>
    %c1 = arith.constant 1 : index
    %c0_5 = arith.constant 0 : index
    %3 = vector.load %arg3[%c1, %c0_5] : memref<3x20xf32, #tpu.memory_space<vmem>>, vector<1x20xf32>
    %c2 = arith.constant 2 : index
    %c0_6 = arith.constant 0 : index
    %4 = vector.load %arg3[%c2, %c0_6] : memref<3x20xf32, #tpu.memory_space<vmem>>, vector<1x20xf32>
    %5 = arith.mulf %0, %0 : vector<2x36xf32>
    %c0_7 = arith.constant 0 : index
    %c0_8 = arith.constant 0 : index
    %6 = vector.load %arg2[%c0_7, %c0_8] : memref<36x20xf32, #tpu.memory_space<vmem>>, vector<36x20xf32>
    %cst = arith.constant dense<0.000000e+00> : vector<2x20xf32>
    %7 = tpu.matmul %5, %6, %cst {dimension_numbers = #tpu.dot_dimension_numbers<[1], [0], [0], [1], [0, 0, 1, 1], [], []>} : vector<2x36xf32>, vector<36x20xf32>, vector<2x20xf32> -> vector<2x20xf32>
    %8 = math.sqrt %7 : vector<2x20xf32>
    %9 = vector.extract_strided_slice %0 {offsets = [0, 0], sizes = [2, 20], strides = [1, 1]} : vector<2x36xf32> to vector<2x20xf32>
    %10 = vector.broadcast %2 : vector<1x20xf32> to vector<2x20xf32>
    %11 = arith.mulf %10, %9 : vector<2x20xf32>
    %cst_9 = arith.constant 1.000000e+00 : f32
    %12 = vector.broadcast %cst_9 : f32 to vector<1x20xf32>
    %13 = arith.subf %12, %2 : vector<1x20xf32>
    %14 = vector.broadcast %13 : vector<1x20xf32> to vector<2x20xf32>
    %15 = arith.mulf %14, %8 : vector<2x20xf32>
    %16 = arith.addf %11, %15 : vector<2x20xf32>
    %cst_10 = arith.constant dense<0.000000e+00> : vector<20xf32>
    %17 = vector.multi_reduction <add>, %16, %cst_10 [0] : vector<2x20xf32> to vector<20xf32>
    %18 = vector.shape_cast %17 : vector<20xf32> to vector<1x20xf32>
    %cst_11 = arith.constant 2.000000e+00 : f32
    %19 = vector.broadcast %cst_11 : f32 to vector<1x20xf32>
    %20 = arith.divf %18, %19 : vector<1x20xf32>
    %21 = vector.broadcast %20 : vector<1x20xf32> to vector<2x20xf32>
    %22 = arith.subf %16, %21 : vector<2x20xf32>
    %23 = arith.mulf %22, %22 : vector<2x20xf32>
    %cst_12 = arith.constant dense<0.000000e+00> : vector<20xf32>
    %24 = vector.multi_reduction <add>, %23, %cst_12 [0] : vector<2x20xf32> to vector<20xf32>
    %25 = vector.shape_cast %24 : vector<20xf32> to vector<1x20xf32>
    %cst_13 = arith.constant 2.000000e+00 : f32
    %26 = vector.broadcast %cst_13 : f32 to vector<1x20xf32>
    %27 = arith.divf %25, %26 : vector<1x20xf32>
    %cst_14 = arith.constant 0.00999999977 : f32
    %28 = vector.broadcast %cst_14 : f32 to vector<1x20xf32>
    %29 = arith.addf %27, %28 : vector<1x20xf32>
    %30 = math.rsqrt %29 : vector<1x20xf32>
    %31 = vector.broadcast %30 : vector<1x20xf32> to vector<2x20xf32>
    %32 = arith.mulf %16, %31 : vector<2x20xf32>
    %33 = vector.broadcast %3 : vector<1x20xf32> to vector<2x20xf32>
    %34 = arith.addf %8, %33 : vector<2x20xf32>
    %35 = tpu.reciprocal %34 : vector<2x20xf32> -> vector<2x20xf32>
    %c0_15 = arith.constant 0 : index
    %c0_16 = arith.constant 0 : index
    %36 = vector.load %arg5[%c0_15, %c0_16] : memref<20x36xf32, #tpu.memory_space<vmem>>, vector<20x36xf32>
    %cst_17 = arith.constant dense<0.000000e+00> : vector<2x36xf32>
    %37 = tpu.matmul %35, %36, %cst_17 {dimension_numbers = #tpu.dot_dimension_numbers<[1], [0], [0], [1], [0, 0, 1, 1], [], []>} : vector<2x20xf32>, vector<20x36xf32>, vector<2x36xf32> -> vector<2x36xf32>
    %38 = arith.mulf %0, %37 : vector<2x36xf32>
    %c0_18 = arith.constant 0 : index
    %c0_19 = arith.constant 0 : index
    %39 = vector.load %arg8[%c0_18, %c0_19] : memref<36x36xf32, #tpu.memory_space<vmem>>, vector<36x36xf32>
    %cst_20 = arith.constant dense<0.000000e+00> : vector<2x36xf32>
    %40 = tpu.matmul %38, %39, %cst_20 {dimension_numbers = #tpu.dot_dimension_numbers<[1], [0], [0], [1], [0, 0, 1, 1], [], []>} : vector<2x36xf32>, vector<36x36xf32>, vector<2x36xf32> -> vector<2x36xf32>
    %c0_21 = arith.constant 0 : index
    %c0_22 = arith.constant 0 : index
    %41 = vector.load %arg9[%c0_21, %c0_22] : memref<36x512xf32, #tpu.memory_space<vmem>>, vector<36x512xf32>
    %cst_23 = arith.constant dense<0.000000e+00> : vector<2x512xf32>
    %42 = tpu.matmul %38, %41, %cst_23 {dimension_numbers = #tpu.dot_dimension_numbers<[1], [0], [0], [1], [0, 0, 1, 1], [], []>} : vector<2x36xf32>, vector<36x512xf32>, vector<2x512xf32> -> vector<2x512xf32>
    %43 = vector.extract_strided_slice %42 {offsets = [0, 0], sizes = [2, 256], strides = [1, 1]} : vector<2x512xf32> to vector<2x256xf32>
    %44 = vector.extract_strided_slice %42 {offsets = [0, 256], sizes = [2, 256], strides = [1, 1]} : vector<2x512xf32> to vector<2x256xf32>
    %45 = arith.mulf %43, %44 : vector<2x256xf32>
    %c0_24 = arith.constant 0 : index
    %c0_25 = arith.constant 0 : index
    %46 = vector.load %arg10[%c0_24, %c0_25] : memref<256x36xf32, #tpu.memory_space<vmem>>, vector<256x36xf32>
    %cst_26 = arith.constant dense<0.000000e+00> : vector<2x36xf32>
    %47 = tpu.matmul %45, %46, %cst_26 {dimension_numbers = #tpu.dot_dimension_numbers<[1], [0], [0], [1], [0, 0, 1, 1], [], []>} : vector<2x256xf32>, vector<256x36xf32>, vector<2x36xf32> -> vector<2x36xf32>
    %48 = arith.addf %40, %47 : vector<2x36xf32>
    %c0_27 = arith.constant 0 : index
    %c0_28 = arith.constant 0 : index
    %49 = vector.load %arg4[%c0_27, %c0_28] : memref<20x20xf32, #tpu.memory_space<vmem>>, vector<20x20xf32>
    %cst_29 = arith.constant dense<0.000000e+00> : vector<2x20xf32>
    %50 = tpu.matmul %32, %49, %cst_29 {dimension_numbers = #tpu.dot_dimension_numbers<[1], [0], [0], [1], [0, 0, 1, 1], [], []>} : vector<2x20xf32>, vector<20x20xf32>, vector<2x20xf32> -> vector<2x20xf32>
    %51 = vector.broadcast %4 : vector<1x20xf32> to vector<2x20xf32>
    %52 = arith.addf %50, %51 : vector<2x20xf32>
    %cst_30 = arith.constant 0.000000e+00 : f32
    %53 = vector.broadcast %cst_30 : f32 to vector<2x20xf32>
    %54 = arith.subf %53, %52 : vector<2x20xf32>
    %55 = math.exp %54 : vector<2x20xf32>
    %cst_31 = arith.constant 1.000000e+00 : f32
    %56 = vector.broadcast %cst_31 : f32 to vector<2x20xf32>
    %57 = arith.addf %56, %55 : vector<2x20xf32>
    %58 = tpu.reciprocal %57 : vector<2x20xf32> -> vector<2x20xf32>
    %59 = arith.mulf %52, %58 : vector<2x20xf32>
    %c0_32 = arith.constant 0 : index
    %c0_33 = arith.constant 0 : index
    %60 = vector.load %arg6[%c0_32, %c0_33] : memref<20x36xf32, #tpu.memory_space<vmem>>, vector<20x36xf32>
    %cst_34 = arith.constant dense<0.000000e+00> : vector<2x36xf32>
    %61 = tpu.matmul %59, %60, %cst_34 {dimension_numbers = #tpu.dot_dimension_numbers<[1], [0], [0], [1], [0, 0, 1, 1], [], []>} : vector<2x20xf32>, vector<20x36xf32>, vector<2x36xf32> -> vector<2x36xf32>
    %c0_35 = arith.constant 0 : index
    %c0_36 = arith.constant 0 : index
    %62 = vector.load %arg7[%c0_35, %c0_36] : memref<1x36xf32, #tpu.memory_space<vmem>>, vector<1x36xf32>
    %63 = vector.broadcast %62 : vector<1x36xf32> to vector<2x36xf32>
    %64 = arith.addf %61, %63 : vector<2x36xf32>
    %65 = arith.mulf %48, %64 : vector<2x36xf32>
    %c0_37 = arith.constant 0 : index
    %c0_38 = arith.constant 0 : index
    %66 = vector.load %arg16[%c0_37, %c0_38] : memref<2x36xf32, #tpu.memory_space<vmem>>, vector<2x36xf32>
    tpu.vector_store %arg16[%c0_37, %c0_38], %65 {strides = array<i32>} : memref<2x36xf32, #tpu.memory_space<vmem>>, vector<2x36xf32>,
    %c0_39 = arith.constant 0 : index
    %c0_40 = arith.constant 0 : index
    %67 = vector.load %arg11[%c0_39, %c0_40] : memref<36x768xf32, #tpu.memory_space<vmem>>, vector<36x768xf32>
    %cst_41 = arith.constant dense<0.000000e+00> : vector<2x768xf32>
    %68 = tpu.matmul %65, %67, %cst_41 {dimension_numbers = #tpu.dot_dimension_numbers<[1], [0], [0], [1], [0, 0, 1, 1], [], []>} : vector<2x36xf32>, vector<36x768xf32>, vector<2x768xf32> -> vector<2x768xf32>
    %69 = vector.extract_strided_slice %68 {offsets = [0, 0], sizes = [2, 384], strides = [1, 1]} : vector<2x768xf32> to vector<2x384xf32>
    %70 = vector.extract_strided_slice %68 {offsets = [0, 384], sizes = [2, 384], strides = [1, 1]} : vector<2x768xf32> to vector<2x384xf32>
    %71 = arith.mulf %1, %69 : vector<2x384xf32>
    %72 = arith.mulf %71, %70 : vector<2x384xf32>
    %c0_42 = arith.constant 0 : index
    %c0_43 = arith.constant 0 : index
    %73 = vector.load %arg12[%c0_42, %c0_43] : memref<384x4xf32, #tpu.memory_space<vmem>>, vector<384x4xf32>
    %cst_44 = arith.constant dense<0.000000e+00> : vector<2x4xf32>
    %74 = tpu.matmul %72, %73, %cst_44 {dimension_numbers = #tpu.dot_dimension_numbers<[1], [0], [0], [1], [0, 0, 1, 1], [], []>} : vector<2x384xf32>, vector<384x4xf32>, vector<2x4xf32> -> vector<2x4xf32>
    %c0_45 = arith.constant 0 : index
    %c0_46 = arith.constant 0 : index
    %75 = vector.load %arg13[%c0_45, %c0_46] : memref<1x4xf32, #tpu.memory_space<vmem>>, vector<1x4xf32>
    %76 = vector.broadcast %75 : vector<1x4xf32> to vector<2x4xf32>
    %77 = arith.addf %74, %76 : vector<2x4xf32>
    %cst_47 = arith.constant 0.000000e+00 : f32
    %78 = vector.broadcast %cst_47 : f32 to vector<2x4xf32>
    %79 = arith.subf %78, %77 : vector<2x4xf32>
    %80 = math.exp %79 : vector<2x4xf32>
    %cst_48 = arith.constant 1.000000e+00 : f32
    %81 = vector.broadcast %cst_48 : f32 to vector<2x4xf32>
    %82 = arith.addf %81, %80 : vector<2x4xf32>
    %83 = tpu.reciprocal %82 : vector<2x4xf32> -> vector<2x4xf32>
    %84 = arith.mulf %77, %83 : vector<2x4xf32>
    %c0_49 = arith.constant 0 : index
    %c0_50 = arith.constant 0 : index
    %85 = vector.load %arg14[%c0_49, %c0_50] : memref<4x384xf32, #tpu.memory_space<vmem>>, vector<4x384xf32>
    %cst_51 = arith.constant dense<0.000000e+00> : vector<2x384xf32>
    %86 = tpu.matmul %84, %85, %cst_51 {dimension_numbers = #tpu.dot_dimension_numbers<[1], [0], [0], [1], [0, 0, 1, 1], [], []>} : vector<2x4xf32>, vector<4x384xf32>, vector<2x384xf32> -> vector<2x384xf32>
    %c3 = arith.constant 3 : index
    %c0_52 = arith.constant 0 : index
    %87 = vector.load %arg15[%c3, %c0_52] : memref<7x384xf32, #tpu.memory_space<vmem>>, vector<1x384xf32>
    %88 = vector.broadcast %87 : vector<1x384xf32> to vector<2x384xf32>
    %89 = arith.mulf %88, %1 : vector<2x384xf32>
    %c0_53 = arith.constant 0 : index
    %c0_54 = arith.constant 0 : index
    %90 = vector.load %arg15[%c0_53, %c0_54] : memref<7x384xf32, #tpu.memory_space<vmem>>, vector<1x384xf32>
    %c381_i32 = arith.constant 381 : i32
    %91 = tpu.dynamic_rotate %1 by %c381_i32 dim 1 : vector<2x384xf32>, i32 -> vector<2x384xf32>
    %92 = vector.broadcast %90 : vector<1x384xf32> to vector<2x384xf32>
    %93 = arith.mulf %92, %91 : vector<2x384xf32>
    %94 = arith.addf %89, %93 : vector<2x384xf32>
    %c1_55 = arith.constant 1 : index
    %c0_56 = arith.constant 0 : index
    %95 = vector.load %arg15[%c1_55, %c0_56] : memref<7x384xf32, #tpu.memory_space<vmem>>, vector<1x384xf32>
    %c382_i32 = arith.constant 382 : i32
    %96 = tpu.dynamic_rotate %1 by %c382_i32 dim 1 : vector<2x384xf32>, i32 -> vector<2x384xf32>
    %97 = vector.broadcast %95 : vector<1x384xf32> to vector<2x384xf32>
    %98 = arith.mulf %97, %96 : vector<2x384xf32>
    %99 = arith.addf %94, %98 : vector<2x384xf32>
    %c2_57 = arith.constant 2 : index
    %c0_58 = arith.constant 0 : index
    %100 = vector.load %arg15[%c2_57, %c0_58] : memref<7x384xf32, #tpu.memory_space<vmem>>, vector<1x384xf32>
    %c383_i32 = arith.constant 383 : i32
    %101 = tpu.dynamic_rotate %1 by %c383_i32 dim 1 : vector<2x384xf32>, i32 -> vector<2x384xf32>
    %102 = vector.broadcast %100 : vector<1x384xf32> to vector<2x384xf32>
    %103 = arith.mulf %102, %101 : vector<2x384xf32>
    %104 = arith.addf %99, %103 : vector<2x384xf32>
    %c4 = arith.constant 4 : index
    %c0_59 = arith.constant 0 : index
    %105 = vector.load %arg15[%c4, %c0_59] : memref<7x384xf32, #tpu.memory_space<vmem>>, vector<1x384xf32>
    %c1_i32 = arith.constant 1 : i32
    %106 = tpu.dynamic_rotate %1 by %c1_i32 dim 1 : vector<2x384xf32>, i32 -> vector<2x384xf32>
    %107 = vector.broadcast %105 : vector<1x384xf32> to vector<2x384xf32>
    %108 = arith.mulf %107, %106 : vector<2x384xf32>
    %109 = arith.addf %104, %108 : vector<2x384xf32>
    %c5 = arith.constant 5 : index
    %c0_60 = arith.constant 0 : index
    %110 = vector.load %arg15[%c5, %c0_60] : memref<7x384xf32, #tpu.memory_space<vmem>>, vector<1x384xf32>
    %c2_i32 = arith.constant 2 : i32
    %111 = tpu.dynamic_rotate %1 by %c2_i32 dim 1 : vector<2x384xf32>, i32 -> vector<2x384xf32>
    %112 = vector.broadcast %110 : vector<1x384xf32> to vector<2x384xf32>
    %113 = arith.mulf %112, %111 : vector<2x384xf32>
    %114 = arith.addf %109, %113 : vector<2x384xf32>
    %c6 = arith.constant 6 : index
    %c0_61 = arith.constant 0 : index
    %115 = vector.load %arg15[%c6, %c0_61] : memref<7x384xf32, #tpu.memory_space<vmem>>, vector<1x384xf32>
    %c3_i32 = arith.constant 3 : i32
    %116 = tpu.dynamic_rotate %1 by %c3_i32 dim 1 : vector<2x384xf32>, i32 -> vector<2x384xf32>
    %117 = vector.broadcast %115 : vector<1x384xf32> to vector<2x384xf32>
    %118 = arith.mulf %117, %116 : vector<2x384xf32>
    %119 = arith.addf %114, %118 : vector<2x384xf32>
    %120 = arith.mulf %119, %86 : vector<2x384xf32>
    %c0_62 = arith.constant 0 : index
    %c0_63 = arith.constant 0 : index
    %121 = vector.load %arg17[%c0_62, %c0_63] : memref<2x384xf32, #tpu.memory_space<vmem>>, vector<2x384xf32>
    tpu.vector_store %arg17[%c0_62, %c0_63], %120 {strides = array<i32>} : memref<2x384xf32, #tpu.memory_space<vmem>>, vector<2x384xf32>,
    return
  }
}

</mosaic_0001>

<llo_original>
// kernel: mini2d_o3_forward.1
$region0: #{mini2d_o3_forward.1}
  #allocation0 [shape = 'u32[]', space=smem, size = 0x4, offset = 0x4, fixed_abs, tag = 'smem constant byte address 0x4 - core index']
  #allocation1 [shape = 'u32[144,128]{1,0:T(1,128)}', space=vmem, size = 0x12000, scoped, tag = 'internal scratch']
  %s0 = inlined_call_operand.vmem [shape: f32[2,36], index: 0, kind: input, shape index: {}]
  %s1 = inlined_call_operand.vmem [shape: f32[2,384], index: 1, kind: input, shape index: {}]
  %s2 = inlined_call_operand.vmem [shape: f32[36,20], index: 2, kind: input, shape index: {}]
  %s3 = inlined_call_operand.vmem [shape: f32[3,20], index: 3, kind: input, shape index: {}]
  %s4 = inlined_call_operand.vmem [shape: f32[20,20], index: 4, kind: input, shape index: {}]
  %s5 = inlined_call_operand.vmem [shape: f32[20,36], index: 5, kind: input, shape index: {}]
  %s6 = inlined_call_operand.vmem [shape: f32[20,36], index: 6, kind: input, shape index: {}]
  %s7 = inlined_call_operand.vmem [shape: f32[1,36], index: 7, kind: input, shape index: {}]
  %s8 = inlined_call_operand.vmem [shape: f32[36,36], index: 8, kind: input, shape index: {}]
  %s9 = inlined_call_operand.vmem [shape: f32[36,512], index: 9, kind: input, shape index: {}]
  %s10 = inlined_call_operand.vmem [shape: f32[256,36], index: 10, kind: input, shape index: {}]
  %s11 = inlined_call_operand.vmem [shape: f32[36,768], index: 11, kind: input, shape index: {}]
  %s12 = inlined_call_operand.vmem [shape: f32[384,4], index: 12, kind: input, shape index: {}]
  %s13 = inlined_call_operand.vmem [shape: f32[1,4], index: 13, kind: input, shape index: {}]
  %s14 = inlined_call_operand.vmem [shape: f32[4,384], index: 14, kind: input, shape index: {}]
  %s15 = inlined_call_operand.vmem [shape: f32[7,384], index: 15, kind: input, shape index: {}]
  %s16 = inlined_call_operand.hbm [shape: f32[2,36], index: 16, kind: output, shape index: {0}]
  %s17 = inlined_call_operand.vmem [shape: f32[2,384], index: 17, kind: output, shape index: {1}]
  %18 = xla_tuple %s16, %s17
  %s19 = sld [smem:[#allocation0]]
  $region82: #{mini2d_o3_forward.1} parent=0
    _
  %s21 = ssub.s32 1, %s19
  %s22 = scalar_select 0, %s21, %s19
  $region1: #{mini2d_o3_forward.1} parent=0
    #allocation2 [shape = 'u8[1024]{0}', space=vmem, size = 0x400, scoped, tag = 'output window, operand 0, single buffered']
    #allocation3 [shape = 's32[1]{0}', space=sflag, size = 0x4, scoped, tag = 'scoped memory for mini2d_o3_forward.1']
    %23 = vsyncpa [#allocation3], 0
    // Predicated region
    $region2: #{mini2d_o3_forward.1} parent=1 // pred_check
      _
    $region3: #{mini2d_o3_forward.1} parent=1 // pred_check_branch
      %25 = sbr.rel (0) target = $region5
    $region4: #{mini2d_o3_forward.1} parent=1 // pred_region
      _
    $region5: #{mini2d_o3_forward.1} parent=1 // pred_fallthru
      _
    // Predicated region
    $region6: #{mini2d_o3_forward.1} parent=1 // pred_check
      _
    $region7: #{mini2d_o3_forward.1} parent=1 // pred_check_branch
      %27 = sbr.rel (0) target = $region9
    $region8: #{mini2d_o3_forward.1} parent=1 // pred_region
      _
    $region9: #{mini2d_o3_forward.1} parent=1 // pred_fallthru
      _
    // Predicated region
    $region10: #{mini2d_o3_forward.1} parent=1 // pred_check
      _
    $region11: #{mini2d_o3_forward.1} parent=1 // pred_check_branch
      %29 = sbr.rel (0) target = $region13
    $region12: #{mini2d_o3_forward.1} parent=1 // pred_region
      _
    $region13: #{mini2d_o3_forward.1} parent=1 // pred_fallthru
      _
    // Predicated region
    $region14: #{mini2d_o3_forward.1} parent=1 // pred_check
      _
    $region15: #{mini2d_o3_forward.1} parent=1 // pred_check_branch
      %31 = sbr.rel (0) target = $region17
    $region16: #{mini2d_o3_forward.1} parent=1 // pred_region
      _
    $region17: #{mini2d_o3_forward.1} parent=1 // pred_fallthru
      _
    // Predicated region
    $region18: #{mini2d_o3_forward.1} parent=1 // pred_check
      _
    $region19: #{mini2d_o3_forward.1} parent=1 // pred_check_branch
      %33 = sbr.rel (0) target = $region21
    $region20: #{mini2d_o3_forward.1} parent=1 // pred_region
      _
    $region21: #{mini2d_o3_forward.1} parent=1 // pred_fallthru
      _
    // Predicated region
    $region22: #{mini2d_o3_forward.1} parent=1 // pred_check
      _
    $region23: #{mini2d_o3_forward.1} parent=1 // pred_check_branch
      %35 = sbr.rel (0) target = $region25
    $region24: #{mini2d_o3_forward.1} parent=1 // pred_region
      _
    $region25: #{mini2d_o3_forward.1} parent=1 // pred_fallthru
      _
    // Predicated region
    $region26: #{mini2d_o3_forward.1} parent=1 // pred_check
      _
    $region27: #{mini2d_o3_forward.1} parent=1 // pred_check_branch
      %37 = sbr.rel (0) target = $region29
    $region28: #{mini2d_o3_forward.1} parent=1 // pred_region
      _
    $region29: #{mini2d_o3_forward.1} parent=1 // pred_fallthru
      _
    // Predicated region
    $region30: #{mini2d_o3_forward.1} parent=1 // pred_check
      _
    $region31: #{mini2d_o3_forward.1} parent=1 // pred_check_branch
      %39 = sbr.rel (0) target = $region33
    $region32: #{mini2d_o3_forward.1} parent=1 // pred_region
      _
    $region33: #{mini2d_o3_forward.1} parent=1 // pred_fallthru
      _
    // Predicated region
    $region34: #{mini2d_o3_forward.1} parent=1 // pred_check
      _
    $region35: #{mini2d_o3_forward.1} parent=1 // pred_check_branch
      %41 = sbr.rel (0) target = $region37
    $region36: #{mini2d_o3_forward.1} parent=1 // pred_region
      _
    $region37: #{mini2d_o3_forward.1} parent=1 // pred_fallthru
      _
    // Predicated region
    $region38: #{mini2d_o3_forward.1} parent=1 // pred_check
      _
    $region39: #{mini2d_o3_forward.1} parent=1 // pred_check_branch
      %43 = sbr.rel (0) target = $region41
    $region40: #{mini2d_o3_forward.1} parent=1 // pred_region
      _
    $region41: #{mini2d_o3_forward.1} parent=1 // pred_fallthru
      _
    // Predicated region
    $region42: #{mini2d_o3_forward.1} parent=1 // pred_check
      _
    $region43: #{mini2d_o3_forward.1} parent=1 // pred_check_branch
      %45 = sbr.rel (0) target = $region45
    $region44: #{mini2d_o3_forward.1} parent=1 // pred_region
      _
    $region45: #{mini2d_o3_forward.1} parent=1 // pred_fallthru
      _
    // Predicated region
    $region46: #{mini2d_o3_forward.1} parent=1 // pred_check
      _
    $region47: #{mini2d_o3_forward.1} parent=1 // pred_check_branch
      %47 = sbr.rel (0) target = $region49
    $region48: #{mini2d_o3_forward.1} parent=1 // pred_region
      _
    $region49: #{mini2d_o3_forward.1} parent=1 // pred_fallthru
      _
    // Predicated region
    $region50: #{mini2d_o3_forward.1} parent=1 // pred_check
      _
    $region51: #{mini2d_o3_forward.1} parent=1 // pred_check_branch
      %49 = sbr.rel (0) target = $region53
    $region52: #{mini2d_o3_forward.1} parent=1 // pred_region
      _
    $region53: #{mini2d_o3_forward.1} parent=1 // pred_fallthru
      _
    // Predicated region
    $region54: #{mini2d_o3_forward.1} parent=1 // pred_check
      _
    $region55: #{mini2d_o3_forward.1} parent=1 // pred_check_branch
      %51 = sbr.rel (0) target = $region57
    $region56: #{mini2d_o3_forward.1} parent=1 // pred_region
      _
    $region57: #{mini2d_o3_forward.1} parent=1 // pred_fallthru
      _
    // Predicated region
    $region58: #{mini2d_o3_forward.1} parent=1 // pred_check
      _
    $region59: #{mini2d_o3_forward.1} parent=1 // pred_check_branch
      %53 = sbr.rel (0) target = $region61
    $region60: #{mini2d_o3_forward.1} parent=1 // pred_region
      _
    $region61: #{mini2d_o3_forward.1} parent=1 // pred_fallthru
      _
    // Predicated region
    $region62: #{mini2d_o3_forward.1} parent=1 // pred_check
      _
    $region63: #{mini2d_o3_forward.1} parent=1 // pred_check_branch
      %55 = sbr.rel (0) target = $region65
    $region64: #{mini2d_o3_forward.1} parent=1 // pred_region
      _
    $region65: #{mini2d_o3_forward.1} parent=1 // pred_fallthru
      _
    %v56 = vld [vmem:[%s0] sm:$0x3]
    %v57 = vld [vmem:[%s1] sm:$0x3f]
    %v58 = vld [vmem:[%s3] sm:$0x1]
    %v59 = vld [vmem:[%s3 + $0x1] sm:$0x1]
    %v60 = vld [vmem:[%s3 + $0x2] sm:$0x1]
    %v61 = vmul.f32 %v56, %v56
    %v62 = vld [vmem:[%s2] sm:$0xff]
    %v63 = vld [vmem:[%s2 + $0x8] sm:$0xff]
    %v64 = vld [vmem:[%s2 + $0x10] sm:$0xff]
    %v65 = vld [vmem:[%s2 + $0x18] sm:$0xff]
    %v66 = vld [vmem:[%s2 + $0x20] sm:$0xf]
    %vm67 = vcmask 293888
    %v69 = vsel %vm67, %v61, 0
    %vm71 = vcmask 1043456
    %v73 = vsel %vm71, %v66, 0
    %75 = vmatprep.subr.mxu0 0.0
    %76 = vmatpush1.msra.mxu0 %v62
    %77 = vmatprep.subr.mxu0 0.0
    %78 = vmatpush1.msra.mxu0 %v63
    %79 = vmatprep.subr.mxu0 0.0
    %80 = vmatpush1.msra.mxu0 %v64
    %81 = vmatprep.subr.mxu0 0.0
    %82 = vmatpush1.msra.mxu0 %v65
    %83 = vmatprep.subr.mxu0 0.0
    %84 = vmatpush1.msra.mxu0 %v73
    %85 = vmatprep.subr.mxu0 0.0
    %86 = vmatpush1.msra.mxu0 0.0
    %87 = vmatprep.subr.mxu0 0.0
    %88 = vmatpush1.msra.mxu0 0.0
    %89 = vmatprep.subr.mxu0 0.0
    %90 = vmatpush1.msra.mxu0 0.0
    %91 = vmatprep.subr.mxu0 0.0
    %92 = vmatpush1.msra.mxu0 0.0
    %93 = vmatprep.subr.mxu0 0.0
    %94 = vmatpush1.msra.mxu0 0.0
    %95 = vmatprep.subr.mxu0 0.0
    %96 = vmatpush1.msra.mxu0 0.0
    %97 = vmatprep.subr.mxu0 0.0
    %98 = vmatpush1.msra.mxu0 0.0
    %99 = vmatprep.subr.mxu0 0.0
    %100 = vmatpush1.msra.mxu0 0.0
    %101 = vmatprep.subr.mxu0 0.0
    %102 = vmatpush1.msra.mxu0 0.0
    %103 = vmatprep.subr.mxu0 0.0
    %104 = vmatpush1.msra.mxu0 0.0
    %105 = vmatprep.subr.mxu0 0.0
    %106 = vmatpush1.msra.mxu0 0.0
    %107 = vmatprep.subr.mxu0 0.0
    %108 = vmatpush1.msra.mxu0 0.0
    %109 = vmatprep.subr.mxu0 0.0
    %110 = vmatpush1.msra.mxu0 0.0
    %111 = vmatprep.subr.mxu0 0.0
    %112 = vmatpush1.msra.mxu0 0.0
    %113 = vmatprep.subr.mxu0 0.0
    %114 = vmatpush1.msra.mxu0 0.0
    %115 = vmatprep.subr.mxu0 0.0
    %116 = vmatpush1.msra.mxu0 0.0
    %117 = vmatprep.subr.mxu0 0.0
    %118 = vmatpush1.msra.mxu0 0.0
    %119 = vmatprep.subr.mxu0 0.0
    %120 = vmatpush1.msra.mxu0 0.0
    %121 = vmatprep.subr.mxu0 0.0
    %122 = vmatpush1.msra.mxu0 0.0
    %123 = vmatprep.subr.mxu0 0.0
    %124 = vmatpush1.msra.mxu0 0.0
    %125 = vmatprep.subr.mxu0 0.0
    %126 = vmatpush1.msra.mxu0 0.0
    %127 = vmatprep.subr.mxu0 0.0
    %128 = vmatpush1.msra.mxu0 0.0
    %129 = vmatprep.subr.mxu0 0.0
    %130 = vmatpush1.msra.mxu0 0.0
    %131 = vmatprep.subr.mxu0 0.0
    %132 = vmatpush1.msra.mxu0 0.0
    %133 = vmatprep.subr.mxu0 0.0
    %134 = vmatpush1.msra.mxu0 0.0
    %135 = vmatprep.subr.mxu0 0.0
    %136 = vmatpush1.msra.mxu0 0.0
    %137 = vmatprep.subr.mxu0 0.0
    %138 = vmatpush1.msra.mxu0 0.0
    %139 = vmatprep.mubr.f32.mxu0 0.0
    %140 = vmatmul.mubr.f32.gmra.mrb[0].mxu0 %v69
    %v141 = vpop.f32.mrb[0].mxu0
    %v142 = vadd.f32 0.0, %v141
    %v143 = vpop.f32.mrb[0].mxu0
    %144 = vdwg.mxu0
    %v145 = vrsqrt.pop %v142
    %v146 = vmul.f32 %v142, %v145
    %vm147 = vcmp.eq.f32.partialorder %v142, inf
    %v148 = vsel %vm147, %v142, %v146
    %vm149 = vcmp.eq.f32.partialorder %v142, 0.0
    %v150 = vand.u32 %v142, 2147483648
    %v151 = vsel %vm149, %v150, %v148
    %v152 = vlaneseq
    %v153 = vshrl.u32 %v152, 7
    %v154 = vsub.s32 0, %v153
    %v155 = vrot.slane %v58, %v154
    %v156 = vmul.f32 %v155, %v56
    %v157 = vsub.f32 1.0, %v58
    %v158 = vlaneseq
    %v159 = vshrl.u32 %v158, 7
    %v160 = vsub.s32 0, %v159
    %v161 = vrot.slane %v157, %v160
    %v162 = vmul.f32 %v161, %v151
    %v163 = vadd.f32 %v156, %v162
    %vm164 = vcmask 156672
    %v165 = vsel %vm164, %v163, 0.0
    %v166 = vrot.slane %v165, 4
    %v167 = vadd.f32 %v165, %v166
    %v168 = vrot.slane %v167, 2
    %v169 = vadd.f32 %v167, %v168
    %v170 = vrot.slane %v169, 1
    %v171 = vadd.f32 %v169, %v170
    %v172 = vrcp.pop 2.0
    %v173 = vmul.f32 %v171, %v172
    %v174 = vsub.f32 %v163, %v173
    %v175 = vmul.f32 %v174, %v174
    %v176 = vsel %vm164, %v175, 0.0
    %v177 = vrot.slane %v176, 4
    %v178 = vadd.f32 %v176, %v177
    %v179 = vrot.slane %v178, 2
    %v180 = vadd.f32 %v178, %v179
    %v181 = vrot.slane %v180, 1
    %v182 = vadd.f32 %v180, %v181
    %v183 = vmul.f32 %v182, %v172
    %v184 = vadd.f32 %v183, 0.01
    %v185 = vrsqrt.pop %v184
    %v186 = vmul.f32 %v163, %v185
    %v187 = vlaneseq
    %v188 = vshrl.u32 %v187, 7
    %v189 = vsub.s32 0, %v188
    %v190 = vrot.slane %v59, %v189
    %v191 = vadd.f32 %v151, %v190
    %v192 = vrcp.pop %v191
    %v193 = vld [vmem:[%s5] sm:$0xff]
    %v194 = vld [vmem:[%s5 + $0x8] sm:$0xff]
    %v195 = vld [vmem:[%s5 + $0x10] sm:$0xf]
    %vm196 = vcmask 162816
    %v198 = vsel %vm196, %v192, 0
    %v201 = vsel %vm71, %v195, 0
    %203 = vmatprep.subr.mxu0 0.0
    %204 = vmatpush1.msra.mxu0 %v193
    %205 = vmatprep.subr.mxu0 0.0
    %206 = vmatpush1.msra.mxu0 %v194
    %207 = vmatprep.subr.mxu0 0.0
    %208 = vmatpush1.msra.mxu0 %v201
    %209 = vmatprep.subr.mxu0 0.0
    %210 = vmatpush1.msra.mxu0 0.0
    %211 = vmatprep.subr.mxu0 0.0
    %212 = vmatpush1.msra.mxu0 0.0
    %213 = vmatprep.subr.mxu0 0.0
    %214 = vmatpush1.msra.mxu0 0.0
    %215 = vmatprep.subr.mxu0 0.0
    %216 = vmatpush1.msra.mxu0 0.0
    %217 = vmatprep.subr.mxu0 0.0
    %218 = vmatpush1.msra.mxu0 0.0
    %219 = vmatprep.subr.mxu0 0.0
    %220 = vmatpush1.msra.mxu0 0.0
    %221 = vmatprep.subr.mxu0 0.0
    %222 = vmatpush1.msra.mxu0 0.0
    %223 = vmatprep.subr.mxu0 0.0
    %224 = vmatpush1.msra.mxu0 0.0
    %225 = vmatprep.subr.mxu0 0.0
    %226 = vmatpush1.msra.mxu0 0.0
    %227 = vmatprep.subr.mxu0 0.0
    %228 = vmatpush1.msra.mxu0 0.0
    %229 = vmatprep.subr.mxu0 0.0
    %230 = vmatpush1.msra.mxu0 0.0
    %231 = vmatprep.subr.mxu0 0.0
    %232 = vmatpush1.msra.mxu0 0.0
    %233 = vmatprep.subr.mxu0 0.0
    %234 = vmatpush1.msra.mxu0 0.0
    %235 = vmatprep.subr.mxu0 0.0
    %236 = vmatpush1.msra.mxu0 0.0
    %237 = vmatprep.subr.mxu0 0.0
    %238 = vmatpush1.msra.mxu0 0.0
    %239 = vmatprep.subr.mxu0 0.0
    %240 = vmatpush1.msra.mxu0 0.0
    %241 = vmatprep.subr.mxu0 0.0
    %242 = vmatpush1.msra.mxu0 0.0
    %243 = vmatprep.subr.mxu0 0.0
    %244 = vmatpush1.msra.mxu0 0.0
    %245 = vmatprep.subr.mxu0 0.0
    %246 = vmatpush1.msra.mxu0 0.0
    %247 = vmatprep.subr.mxu0 0.0
    %248 = vmatpush1.msra.mxu0 0.0
    %249 = vmatprep.subr.mxu0 0.0
    %250 = vmatpush1.msra.mxu0 0.0
    %251 = vmatprep.subr.mxu0 0.0
    %252 = vmatpush1.msra.mxu0 0.0
    %253 = vmatprep.subr.mxu0 0.0
    %254 = vmatpush1.msra.mxu0 0.0
    %255 = vmatprep.subr.mxu0 0.0
    %256 = vmatpush1.msra.mxu0 0.0
    %257 = vmatprep.subr.mxu0 0.0
    %258 = vmatpush1.msra.mxu0 0.0
    %259 = vmatprep.subr.mxu0 0.0
    %260 = vmatpush1.msra.mxu0 0.0
    %261 = vmatprep.subr.mxu0 0.0
    %262 = vmatpush1.msra.mxu0 0.0
    %263 = vmatprep.subr.mxu0 0.0
    %264 = vmatpush1.msra.mxu0 0.0
    %265 = vmatprep.subr.mxu0 0.0
    %266 = vmatpush1.msra.mxu0 0.0
    %267 = vmatprep.mubr.f32.mxu0 0.0
    %268 = vmatmul.mubr.f32.gmra.mrb[0].mxu0 %v198
    %v269 = vpop.f32.mrb[0].mxu0
    %v270 = vadd.f32 0.0, %v269
    %v271 = vpop.f32.mrb[0].mxu0
    %272 = vdwg.mxu0
    %v273 = vmul.f32 %v56, %v270
    %v274 = vld [vmem:[%s8] sm:$0xff]
    %v275 = vld [vmem:[%s8 + $0x8] sm:$0xff]
    %v276 = vld [vmem:[%s8 + $0x10] sm:$0xff]
    %v277 = vld [vmem:[%s8 + $0x18] sm:$0xff]
    %v278 = vld [vmem:[%s8 + $0x20] sm:$0xf]
    %v279 = vld [vmem:[%s9] sm:$0xff]
    %v280 = vld [vmem:[%s9 + $0x8] sm:$0xff]
    %v281 = vld [vmem:[%s9 + $0x10] sm:$0xff]
    %v282 = vld [vmem:[%s9 + $0x18] sm:$0xff]
    %v283 = vld [vmem:[%s9 + $0x20] sm:$0xff]
    %v284 = vld [vmem:[%s9 + $0x28] sm:$0xff]
    %v285 = vld [vmem:[%s9 + $0x30] sm:$0xff]
    %v286 = vld [vmem:[%s9 + $0x38] sm:$0xff]
    %v287 = vld [vmem:[%s9 + $0x40] sm:$0xff]
    %v288 = vld [vmem:[%s9 + $0x48] sm:$0xff]
    %v289 = vld [vmem:[%s9 + $0x50] sm:$0xff]
    %v290 = vld [vmem:[%s9 + $0x58] sm:$0xff]
    %v291 = vld [vmem:[%s9 + $0x60] sm:$0xff]
    %v292 = vld [vmem:[%s9 + $0x68] sm:$0xff]
    %v293 = vld [vmem:[%s9 + $0x70] sm:$0xff]
    %v294 = vld [vmem:[%s9 + $0x78] sm:$0xff]
    %v295 = vld [vmem:[%s9 + $0x80] sm:$0xf]
    %v296 = vld [vmem:[%s9 + $0x88] sm:$0xf]
    %v297 = vld [vmem:[%s9 + $0x90] sm:$0xf]
    %v298 = vld [vmem:[%s9 + $0x98] sm:$0xf]
    %v300 = vsel %vm67, %v273, 0
    %v303 = vsel %vm71, %v295, 0
    %v306 = vsel %vm71, %v296, 0
    %v309 = vsel %vm71, %v297, 0
    %v312 = vsel %vm71, %v298, 0
    %314 = vmatprep.subr.mxu0 %v280
    %315 = vmatpush1.msra.mxu0 %v279
    %316 = vmatprep.subr.mxu0 %v284
    %317 = vmatpush1.msra.mxu0 %v283
    %318 = vmatprep.subr.mxu0 %v288
    %319 = vmatpush1.msra.mxu0 %v287
    %320 = vmatprep.subr.mxu0 %v292
    %321 = vmatpush1.msra.mxu0 %v291
    %322 = vmatprep.subr.mxu0 %v306
    %323 = vmatpush1.msra.mxu0 %v303
    %324 = vmatprep.subr.mxu0 0.0
    %325 = vmatpush1.msra.mxu0 0.0
    %326 = vmatprep.subr.mxu0 0.0
    %327 = vmatpush1.msra.mxu0 0.0
    %328 = vmatprep.subr.mxu0 0.0
    %329 = vmatpush1.msra.mxu0 0.0
    %330 = vmatprep.subr.mxu0 0.0
    %331 = vmatpush1.msra.mxu0 0.0
    %332 = vmatprep.subr.mxu0 0.0
    %333 = vmatpush1.msra.mxu0 0.0
    %334 = vmatprep.subr.mxu0 0.0
    %335 = vmatpush1.msra.mxu0 0.0
    %336 = vmatprep.subr.mxu0 0.0
    %337 = vmatpush1.msra.mxu0 0.0
    %338 = vmatprep.subr.mxu0 0.0
    %339 = vmatpush1.msra.mxu0 0.0
    %340 = vmatprep.subr.mxu0 0.0
    %341 = vmatpush1.msra.mxu0 0.0
    %342 = vmatprep.subr.mxu0 0.0
    %343 = vmatpush1.msra.mxu0 0.0
    %344 = vmatprep.subr.mxu0 0.0
    %345 = vmatpush1.msra.mxu0 0.0
    %346 = vmatprep.subr.mxu0 0.0
    %347 = vmatpush1.msra.mxu0 0.0
    %348 = vmatprep.subr.mxu0 0.0
    %349 = vmatpush1.msra.mxu0 0.0
    %350 = vmatprep.subr.mxu0 0.0
    %351 = vmatpush1.msra.mxu0 0.0
    %352 = vmatprep.subr.mxu0 0.0
    %353 = vmatpush1.msra.mxu0 0.0
    %354 = vmatprep.subr.mxu0 0.0
    %355 = vmatpush1.msra.mxu0 0.0
    %356 = vmatprep.subr.mxu0 0.0
    %357 = vmatpush1.msra.mxu0 0.0
    %358 = vmatprep.subr.mxu0 0.0
    %359 = vmatpush1.msra.mxu0 0.0
    %360 = vmatprep.subr.mxu0 0.0
    %361 = vmatpush1.msra.mxu0 0.0
    %362 = vmatprep.subr.mxu0 0.0
    %363 = vmatpush1.msra.mxu0 0.0
    %364 = vmatprep.subr.mxu0 0.0
    %365 = vmatpush1.msra.mxu0 0.0
    %366 = vmatprep.subr.mxu0 0.0
    %367 = vmatpush1.msra.mxu0 0.0
    %368 = vmatprep.subr.mxu0 0.0
    %369 = vmatpush1.msra.mxu0 0.0
    %370 = vmatprep.subr.mxu0 0.0
    %371 = vmatpush1.msra.mxu0 0.0
    %372 = vmatprep.subr.mxu0 0.0
    %373 = vmatpush1.msra.mxu0 0.0
    %374 = vmatprep.subr.mxu0 0.0
    %375 = vmatpush1.msra.mxu0 0.0
    %376 = vmatprep.subr.mxu0 0.0
    %377 = vmatpush1.msra.mxu0 0.0
    %378 = vmatprep.mubr.f32.mxu0 0.0
    %379 = vmatmul.mubr.f32.gmra.mrb[0].mxu0 %v300
    %v380 = vpop.f32.mrb[0].mxu0
    %v381 = vadd.f32 0.0, %v380
    %v382 = vpop.f32.mrb[0].mxu0
    %v383 = vadd.f32 0.0, %v382
    %384 = vdwg.mxu0
    %385 = vmatprep.subr.mxu0 %v282
    %386 = vmatpush1.msra.mxu0 %v281
    %387 = vmatprep.subr.mxu0 %v286
    %388 = vmatpush1.msra.mxu0 %v285
    %389 = vmatprep.subr.mxu0 %v290
    %390 = vmatpush1.msra.mxu0 %v289
    %391 = vmatprep.subr.mxu0 %v294
    %392 = vmatpush1.msra.mxu0 %v293
    %393 = vmatprep.subr.mxu0 %v312
    %394 = vmatpush1.msra.mxu0 %v309
    %395 = vmatprep.subr.mxu0 0.0
    %396 = vmatpush1.msra.mxu0 0.0
    %397 = vmatprep.subr.mxu0 0.0
    %398 = vmatpush1.msra.mxu0 0.0
    %399 = vmatprep.subr.mxu0 0.0
    %400 = vmatpush1.msra.mxu0 0.0
    %401 = vmatprep.subr.mxu0 0.0
    %402 = vmatpush1.msra.mxu0 0.0
    %403 = vmatprep.subr.mxu0 0.0
    %404 = vmatpush1.msra.mxu0 0.0
    %405 = vmatprep.subr.mxu0 0.0
    %406 = vmatpush1.msra.mxu0 0.0
    %407 = vmatprep.subr.mxu0 0.0
    %408 = vmatpush1.msra.mxu0 0.0
    %409 = vmatprep.subr.mxu0 0.0
    %410 = vmatpush1.msra.mxu0 0.0
    %411 = vmatprep.subr.mxu0 0.0
    %412 = vmatpush1.msra.mxu0 0.0
    %413 = vmatprep.subr.mxu0 0.0
    %414 = vmatpush1.msra.mxu0 0.0
    %415 = vmatprep.subr.mxu0 0.0
    %416 = vmatpush1.msra.mxu0 0.0
    %417 = vmatprep.subr.mxu0 0.0
    %418 = vmatpush1.msra.mxu0 0.0
    %419 = vmatprep.subr.mxu0 0.0
    %420 = vmatpush1.msra.mxu0 0.0
    %421 = vmatprep.subr.mxu0 0.0
    %422 = vmatpush1.msra.mxu0 0.0
    %423 = vmatprep.subr.mxu0 0.0
    %424 = vmatpush1.msra.mxu0 0.0
    %425 = vmatprep.subr.mxu0 0.0
    %426 = vmatpush1.msra.mxu0 0.0
    %427 = vmatprep.subr.mxu0 0.0
    %428 = vmatpush1.msra.mxu0 0.0
    %429 = vmatprep.subr.mxu0 0.0
    %430 = vmatpush1.msra.mxu0 0.0
    %431 = vmatprep.subr.mxu0 0.0
    %432 = vmatpush1.msra.mxu0 0.0
    %433 = vmatprep.subr.mxu0 0.0
    %434 = vmatpush1.msra.mxu0 0.0
    %435 = vmatprep.subr.mxu0 0.0
    %436 = vmatpush1.msra.mxu0 0.0
    %437 = vmatprep.subr.mxu0 0.0
    %438 = vmatpush1.msra.mxu0 0.0
    %439 = vmatprep.subr.mxu0 0.0
    %440 = vmatpush1.msra.mxu0 0.0
    %441 = vmatprep.subr.mxu0 0.0
    %442 = vmatpush1.msra.mxu0 0.0
    %443 = vmatprep.subr.mxu0 0.0
    %444 = vmatpush1.msra.mxu0 0.0
    %445 = vmatprep.subr.mxu0 0.0
    %446 = vmatpush1.msra.mxu0 0.0
    %447 = vmatprep.subr.mxu0 0.0
    %448 = vmatpush1.msra.mxu0 0.0
    %449 = vmatprep.mubr.f32.mxu0 0.0
    %450 = vmatmul.mubr.f32.gmra.mrb[0].mxu0 %v300
    %v451 = vpop.f32.mrb[0].mxu0
    %v452 = vadd.f32 0.0, %v451
    %v453 = vpop.f32.mrb[0].mxu0
    %v454 = vadd.f32 0.0, %v453
    %455 = vdwg.mxu0
    %v456 = vmul.f32 %v381, %v452
    %v457 = vmul.f32 %v383, %v454
    %v458 = vld [vmem:[%s10] sm:$0xff]
    %v459 = vld [vmem:[%s10 + $0x8] sm:$0xff]
    %v460 = vld [vmem:[%s10 + $0x10] sm:$0xff]
    %v461 = vld [vmem:[%s10 + $0x18] sm:$0xff]
    %v462 = vld [vmem:[%s10 + $0x20] sm:$0xff]
    %v463 = vld [vmem:[%s10 + $0x28] sm:$0xff]
    %v464 = vld [vmem:[%s10 + $0x30] sm:$0xff]
    %v465 = vld [vmem:[%s10 + $0x38] sm:$0xff]
    %v466 = vld [vmem:[%s10 + $0x40] sm:$0xff]
    %v467 = vld [vmem:[%s10 + $0x48] sm:$0xff]
    %v468 = vld [vmem:[%s10 + $0x50] sm:$0xff]
    %v469 = vld [vmem:[%s10 + $0x58] sm:$0xff]
    %v470 = vld [vmem:[%s10 + $0x60] sm:$0xff]
    %v471 = vld [vmem:[%s10 + $0x68] sm:$0xff]
    %v472 = vld [vmem:[%s10 + $0x70] sm:$0xff]
    %v473 = vld [vmem:[%s10 + $0x78] sm:$0xff]
    %v474 = vld [vmem:[%s10 + $0x80] sm:$0xff]
    %v475 = vld [vmem:[%s10 + $0x88] sm:$0xff]
    %v476 = vld [vmem:[%s10 + $0x90] sm:$0xff]
    %v477 = vld [vmem:[%s10 + $0x98] sm:$0xff]
    %v478 = vld [vmem:[%s10 + $0xa0] sm:$0xff]
    %v479 = vld [vmem:[%s10 + $0xa8] sm:$0xff]
    %v480 = vld [vmem:[%s10 + $0xb0] sm:$0xff]
    %v481 = vld [vmem:[%s10 + $0xb8] sm:$0xff]
    %v482 = vld [vmem:[%s10 + $0xc0] sm:$0xff]
    %v483 = vld [vmem:[%s10 + $0xc8] sm:$0xff]
    %v484 = vld [vmem:[%s10 + $0xd0] sm:$0xff]
    %v485 = vld [vmem:[%s10 + $0xd8] sm:$0xff]
    %v486 = vld [vmem:[%s10 + $0xe0] sm:$0xff]
    %v487 = vld [vmem:[%s10 + $0xe8] sm:$0xff]
    %v488 = vld [vmem:[%s10 + $0xf0] sm:$0xff]
    %v489 = vld [vmem:[%s10 + $0xf8] sm:$0xff]
    %490 = vmatprep.subr.mxu0 0.0
    %491 = vmatpush1.msra.mxu0 %v458
    %492 = vmatprep.subr.mxu0 0.0
    %493 = vmatpush1.msra.mxu0 %v459
    %494 = vmatprep.subr.mxu0 0.0
    %495 = vmatpush1.msra.mxu0 %v460
    %496 = vmatprep.subr.mxu0 0.0
    %497 = vmatpush1.msra.mxu0 %v461
    %498 = vmatprep.subr.mxu0 0.0
    %499 = vmatpush1.msra.mxu0 %v462
    %500 = vmatprep.subr.mxu0 0.0
    %501 = vmatpush1.msra.mxu0 %v463
    %502 = vmatprep.subr.mxu0 0.0
    %503 = vmatpush1.msra.mxu0 %v464
    %504 = vmatprep.subr.mxu0 0.0
    %505 = vmatpush1.msra.mxu0 %v465
    %506 = vmatprep.subr.mxu0 0.0
    %507 = vmatpush1.msra.mxu0 %v466
    %508 = vmatprep.subr.mxu0 0.0
    %509 = vmatpush1.msra.mxu0 %v467
    %510 = vmatprep.subr.mxu0 0.0
    %511 = vmatpush1.msra.mxu0 %v468
    %512 = vmatprep.subr.mxu0 0.0
    %513 = vmatpush1.msra.mxu0 %v469
    %514 = vmatprep.subr.mxu0 0.0
    %515 = vmatpush1.msra.mxu0 %v470
    %516 = vmatprep.subr.mxu0 0.0
    %517 = vmatpush1.msra.mxu0 %v471
    %518 = vmatprep.subr.mxu0 0.0
    %519 = vmatpush1.msra.mxu0 %v472
    %520 = vmatprep.subr.mxu0 0.0
    %521 = vmatpush1.msra.mxu0 %v473
    %522 = vmatprep.subr.mxu0 0.0
    %523 = vmatpush1.msra.mxu0 %v474
    %524 = vmatprep.subr.mxu0 0.0
    %525 = vmatpush1.msra.mxu0 %v475
    %526 = vmatprep.subr.mxu0 0.0
    %527 = vmatpush1.msra.mxu0 %v476
    %528 = vmatprep.subr.mxu0 0.0
    %529 = vmatpush1.msra.mxu0 %v477
    %530 = vmatprep.subr.mxu0 0.0
    %531 = vmatpush1.msra.mxu0 %v478
    %532 = vmatprep.subr.mxu0 0.0
    %533 = vmatpush1.msra.mxu0 %v479
    %534 = vmatprep.subr.mxu0 0.0
    %535 = vmatpush1.msra.mxu0 %v480
    %536 = vmatprep.subr.mxu0 0.0
    %537 = vmatpush1.msra.mxu0 %v481
    %538 = vmatprep.subr.mxu0 0.0
    %539 = vmatpush1.msra.mxu0 %v482
    %540 = vmatprep.subr.mxu0 0.0
    %541 = vmatpush1.msra.mxu0 %v483
    %542 = vmatprep.subr.mxu0 0.0
    %543 = vmatpush1.msra.mxu0 %v484
    %544 = vmatprep.subr.mxu0 0.0
    %545 = vmatpush1.msra.mxu0 %v485
    %546 = vmatprep.subr.mxu0 0.0
    %547 = vmatpush1.msra.mxu0 %v486
    %548 = vmatprep.subr.mxu0 0.0
    %549 = vmatpush1.msra.mxu0 %v487
    %550 = vmatprep.subr.mxu0 0.0
    %551 = vmatpush1.msra.mxu0 %v488
    %552 = vmatprep.subr.mxu0 0.0
    %553 = vmatpush1.msra.mxu0 %v489
    %554 = vmatprep.mubr.f32.mxu0 %v457
    %555 = vmatmul.mubr.f32.gmra.mrb[0].mxu0 %v456
    %v556 = vpop.f32.mrb[0].mxu0
    %v557 = vadd.f32 0.0, %v556
    %v558 = vpop.f32.mrb[0].mxu0
    %559 = vdwg.mxu0
    %v561 = vsel %vm71, %v278, 0
    %563 = vmatprep.subr.mxu0 0.0
    %564 = vmatpush1.msra.mxu0 %v274
    %565 = vmatprep.subr.mxu0 0.0
    %566 = vmatpush1.msra.mxu0 %v275
    %567 = vmatprep.subr.mxu0 0.0
    %568 = vmatpush1.msra.mxu0 %v276
    %569 = vmatprep.subr.mxu0 0.0
    %570 = vmatpush1.msra.mxu0 %v277
    %571 = vmatprep.subr.mxu0 0.0
    %572 = vmatpush1.msra.mxu0 %v561
    %573 = vmatprep.subr.mxu0 0.0
    %574 = vmatpush1.msra.mxu0 0.0
    %575 = vmatprep.subr.mxu0 0.0
    %576 = vmatpush1.msra.mxu0 0.0
    %577 = vmatprep.subr.mxu0 0.0
    %578 = vmatpush1.msra.mxu0 0.0
    %579 = vmatprep.subr.mxu0 0.0
    %580 = vmatpush1.msra.mxu0 0.0
    %581 = vmatprep.subr.mxu0 0.0
    %582 = vmatpush1.msra.mxu0 0.0
    %583 = vmatprep.subr.mxu0 0.0
    %584 = vmatpush1.msra.mxu0 0.0
    %585 = vmatprep.subr.mxu0 0.0
    %586 = vmatpush1.msra.mxu0 0.0
    %587 = vmatprep.subr.mxu0 0.0
    %588 = vmatpush1.msra.mxu0 0.0
    %589 = vmatprep.subr.mxu0 0.0
    %590 = vmatpush1.msra.mxu0 0.0
    %591 = vmatprep.subr.mxu0 0.0
    %592 = vmatpush1.msra.mxu0 0.0
    %593 = vmatprep.subr.mxu0 0.0
    %594 = vmatpush1.msra.mxu0 0.0
    %595 = vmatprep.subr.mxu0 0.0
    %596 = vmatpush1.msra.mxu0 0.0
    %597 = vmatprep.subr.mxu0 0.0
    %598 = vmatpush1.msra.mxu0 0.0
    %599 = vmatprep.subr.mxu0 0.0
    %600 = vmatpush1.msra.mxu0 0.0
    %601 = vmatprep.subr.mxu0 0.0
    %602 = vmatpush1.msra.mxu0 0.0
    %603 = vmatprep.subr.mxu0 0.0
    %604 = vmatpush1.msra.mxu0 0.0
    %605 = vmatprep.subr.mxu0 0.0
    %606 = vmatpush1.msra.mxu0 0.0
    %607 = vmatprep.subr.mxu0 0.0
    %608 = vmatpush1.msra.mxu0 0.0
    %609 = vmatprep.subr.mxu0 0.0
    %610 = vmatpush1.msra.mxu0 0.0
    %611 = vmatprep.subr.mxu0 0.0
    %612 = vmatpush1.msra.mxu0 0.0
    %613 = vmatprep.subr.mxu0 0.0
    %614 = vmatpush1.msra.mxu0 0.0
    %615 = vmatprep.subr.mxu0 0.0
    %616 = vmatpush1.msra.mxu0 0.0
    %617 = vmatprep.subr.mxu0 0.0
    %618 = vmatpush1.msra.mxu0 0.0
    %619 = vmatprep.subr.mxu0 0.0
    %620 = vmatpush1.msra.mxu0 0.0
    %621 = vmatprep.subr.mxu0 0.0
    %622 = vmatpush1.msra.mxu0 0.0
    %623 = vmatprep.subr.mxu0 0.0
    %624 = vmatpush1.msra.mxu0 0.0
    %625 = vmatprep.subr.mxu0 0.0
    %626 = vmatpush1.msra.mxu0 0.0
    %627 = vmatprep.mubr.f32.mxu0 0.0
    %628 = vmatmul.mubr.f32.gmra.mrb[0].mxu0 %v300
    %v629 = vpop.f32.mrb[0].mxu0
    %v630 = vadd.f32 %v557, %v629
    %v631 = vpop.f32.mrb[0].mxu0
    %632 = vdwg.mxu0
    %v633 = vld [vmem:[%s4] sm:$0xff]
    %v634 = vld [vmem:[%s4 + $0x8] sm:$0xff]
    %v635 = vld [vmem:[%s4 + $0x10] sm:$0xf]
    %v636 = vlaneseq
    %v637 = vshrl.u32 %v636, 7
    %v638 = vsub.s32 0, %v637
    %v639 = vrot.slane %v60, %v638
    %v641 = vsel %vm196, %v186, 0
    %v644 = vsel %vm71, %v635, 0
    %646 = vmatprep.subr.mxu0 0.0
    %647 = vmatpush1.msra.mxu0 %v633
    %648 = vmatprep.subr.mxu0 0.0
    %649 = vmatpush1.msra.mxu0 %v634
    %650 = vmatprep.subr.mxu0 0.0
    %651 = vmatpush1.msra.mxu0 %v644
    %652 = vmatprep.subr.mxu0 0.0
    %653 = vmatpush1.msra.mxu0 0.0
    %654 = vmatprep.subr.mxu0 0.0
    %655 = vmatpush1.msra.mxu0 0.0
    %656 = vmatprep.subr.mxu0 0.0
    %657 = vmatpush1.msra.mxu0 0.0
    %658 = vmatprep.subr.mxu0 0.0
    %659 = vmatpush1.msra.mxu0 0.0
    %660 = vmatprep.subr.mxu0 0.0
    %661 = vmatpush1.msra.mxu0 0.0
    %662 = vmatprep.subr.mxu0 0.0
    %663 = vmatpush1.msra.mxu0 0.0
    %664 = vmatprep.subr.mxu0 0.0
    %665 = vmatpush1.msra.mxu0 0.0
    %666 = vmatprep.subr.mxu0 0.0
    %667 = vmatpush1.msra.mxu0 0.0
    %668 = vmatprep.subr.mxu0 0.0
    %669 = vmatpush1.msra.mxu0 0.0
    %670 = vmatprep.subr.mxu0 0.0
    %671 = vmatpush1.msra.mxu0 0.0
    %672 = vmatprep.subr.mxu0 0.0
    %673 = vmatpush1.msra.mxu0 0.0
    %674 = vmatprep.subr.mxu0 0.0
    %675 = vmatpush1.msra.mxu0 0.0
    %676 = vmatprep.subr.mxu0 0.0
    %677 = vmatpush1.msra.mxu0 0.0
    %678 = vmatprep.subr.mxu0 0.0
    %679 = vmatpush1.msra.mxu0 0.0
    %680 = vmatprep.subr.mxu0 0.0
    %681 = vmatpush1.msra.mxu0 0.0
    %682 = vmatprep.subr.mxu0 0.0
    %683 = vmatpush1.msra.mxu0 0.0
    %684 = vmatprep.subr.mxu0 0.0
    %685 = vmatpush1.msra.mxu0 0.0
    %686 = vmatprep.subr.mxu0 0.0
    %687 = vmatpush1.msra.mxu0 0.0
    %688 = vmatprep.subr.mxu0 0.0
    %689 = vmatpush1.msra.mxu0 0.0
    %690 = vmatprep.subr.mxu0 0.0
    %691 = vmatpush1.msra.mxu0 0.0
    %692 = vmatprep.subr.mxu0 0.0
    %693 = vmatpush1.msra.mxu0 0.0
    %694 = vmatprep.subr.mxu0 0.0
    %695 = vmatpush1.msra.mxu0 0.0
    %696 = vmatprep.subr.mxu0 0.0
    %697 = vmatpush1.msra.mxu0 0.0
    %698 = vmatprep.subr.mxu0 0.0
    %699 = vmatpush1.msra.mxu0 0.0
    %700 = vmatprep.subr.mxu0 0.0
    %701 = vmatpush1.msra.mxu0 0.0
    %702 = vmatprep.subr.mxu0 0.0
    %703 = vmatpush1.msra.mxu0 0.0
    %704 = vmatprep.subr.mxu0 0.0
    %705 = vmatpush1.msra.mxu0 0.0
    %706 = vmatprep.subr.mxu0 0.0
    %707 = vmatpush1.msra.mxu0 0.0
    %708 = vmatprep.subr.mxu0 0.0
    %709 = vmatpush1.msra.mxu0 0.0
    %710 = vmatprep.mubr.f32.mxu0 0.0
    %711 = vmatmul.mubr.f32.gmra.mrb[0].mxu0 %v641
    %v712 = vpop.f32.mrb[0].mxu0
    %v713 = vadd.f32 %v639, %v712
    %v714 = vpop.f32.mrb[0].mxu0
    %715 = vdwg.mxu0
    %v716 = vsub.f32 0.0, %v713
    %v717 = vmul.f32 %v716, 1.442695
    %v718 = vpow.pop %v717
    %v719 = vadd.f32 %v718, 1.0
    %v720 = vrcp.pop %v719
    %v721 = vmul.f32 %v713, %v720
    %v722 = vld [vmem:[%s6] sm:$0xff]
    %v723 = vld [vmem:[%s6 + $0x8] sm:$0xff]
    %v724 = vld [vmem:[%s6 + $0x10] sm:$0xf]
    %v725 = vld [vmem:[%s7] sm:$0x1]
    %v727 = vlaneseq
    %v728 = vshrl.u32 %v727, 7
    %v729 = vsub.s32 0, %v728
    %v730 = vrot.slane %v725, %v729
    %v733 = vsel %vm196, %v721, 0
    %v736 = vsel %vm71, %v724, 0
    %738 = vmatprep.subr.mxu0 0.0
    %739 = vmatpush1.msra.mxu0 %v722
    %740 = vmatprep.subr.mxu0 0.0
    %741 = vmatpush1.msra.mxu0 %v723
    %742 = vmatprep.subr.mxu0 0.0
    %743 = vmatpush1.msra.mxu0 %v736
    %744 = vmatprep.subr.mxu0 0.0
    %745 = vmatpush1.msra.mxu0 0.0
    %746 = vmatprep.subr.mxu0 0.0
    %747 = vmatpush1.msra.mxu0 0.0
    %748 = vmatprep.subr.mxu0 0.0
    %749 = vmatpush1.msra.mxu0 0.0
    %750 = vmatprep.subr.mxu0 0.0
    %751 = vmatpush1.msra.mxu0 0.0
    %752 = vmatprep.subr.mxu0 0.0
    %753 = vmatpush1.msra.mxu0 0.0
    %754 = vmatprep.subr.mxu0 0.0
    %755 = vmatpush1.msra.mxu0 0.0
    %756 = vmatprep.subr.mxu0 0.0
    %757 = vmatpush1.msra.mxu0 0.0
    %758 = vmatprep.subr.mxu0 0.0
    %759 = vmatpush1.msra.mxu0 0.0
    %760 = vmatprep.subr.mxu0 0.0
    %761 = vmatpush1.msra.mxu0 0.0
    %762 = vmatprep.subr.mxu0 0.0
    %763 = vmatpush1.msra.mxu0 0.0
    %764 = vmatprep.subr.mxu0 0.0
    %765 = vmatpush1.msra.mxu0 0.0
    %766 = vmatprep.subr.mxu0 0.0
    %767 = vmatpush1.msra.mxu0 0.0
    %768 = vmatprep.subr.mxu0 0.0
    %769 = vmatpush1.msra.mxu0 0.0
    %770 = vmatprep.subr.mxu0 0.0
    %771 = vmatpush1.msra.mxu0 0.0
    %772 = vmatprep.subr.mxu0 0.0
    %773 = vmatpush1.msra.mxu0 0.0
    %774 = vmatprep.subr.mxu0 0.0
    %775 = vmatpush1.msra.mxu0 0.0
    %776 = vmatprep.subr.mxu0 0.0
    %777 = vmatpush1.msra.mxu0 0.0
    %778 = vmatprep.subr.mxu0 0.0
    %779 = vmatpush1.msra.mxu0 0.0
    %780 = vmatprep.subr.mxu0 0.0
    %781 = vmatpush1.msra.mxu0 0.0
    %782 = vmatprep.subr.mxu0 0.0
    %783 = vmatpush1.msra.mxu0 0.0
    %784 = vmatprep.subr.mxu0 0.0
    %785 = vmatpush1.msra.mxu0 0.0
    %786 = vmatprep.subr.mxu0 0.0
    %787 = vmatpush1.msra.mxu0 0.0
    %788 = vmatprep.subr.mxu0 0.0
    %789 = vmatpush1.msra.mxu0 0.0
    %790 = vmatprep.subr.mxu0 0.0
    %791 = vmatpush1.msra.mxu0 0.0
    %792 = vmatprep.subr.mxu0 0.0
    %793 = vmatpush1.msra.mxu0 0.0
    %794 = vmatprep.subr.mxu0 0.0
    %795 = vmatpush1.msra.mxu0 0.0
    %796 = vmatprep.subr.mxu0 0.0
    %797 = vmatpush1.msra.mxu0 0.0
    %798 = vmatprep.subr.mxu0 0.0
    %799 = vmatpush1.msra.mxu0 0.0
    %800 = vmatprep.subr.mxu0 0.0
    %801 = vmatpush1.msra.mxu0 0.0
    %802 = vmatprep.mubr.f32.mxu0 0.0
    %803 = vmatmul.mubr.f32.gmra.mrb[0].mxu0 %v733
    %v804 = vpop.f32.mrb[0].mxu0
    %v805 = vadd.f32 %v730, %v804
    %v806 = vpop.f32.mrb[0].mxu0
    %807 = vdwg.mxu0
    %v808 = vmul.f32 %v630, %v805
    %vm809 = vcmask 287744
    %810 = vst.msk [vmem:[#allocation2] sm:$0x3] %vm809, %v808
    %v811 = vld [vmem:[%s11] sm:$0xff]
    %v812 = vld [vmem:[%s11 + $0x8] sm:$0xff]
    %v813 = vld [vmem:[%s11 + $0x10] sm:$0xff]
    %v814 = vld [vmem:[%s11 + $0x18] sm:$0xff]
    %v815 = vld [vmem:[%s11 + $0x20] sm:$0xff]
    %v816 = vld [vmem:[%s11 + $0x28] sm:$0xff]
    %v817 = vld [vmem:[%s11 + $0x30] sm:$0xff]
    %v818 = vld [vmem:[%s11 + $0x38] sm:$0xff]
    %v819 = vld [vmem:[%s11 + $0x40] sm:$0xff]
    %v820 = vld [vmem:[%s11 + $0x48] sm:$0xff]
    %v821 = vld [vmem:[%s11 + $0x50] sm:$0xff]
    %v822 = vld [vmem:[%s11 + $0x58] sm:$0xff]
    %v823 = vld [vmem:[%s11 + $0x60] sm:$0xff]
    %v824 = vld [vmem:[%s11 + $0x68] sm:$0xff]
    %v825 = vld [vmem:[%s11 + $0x70] sm:$0xff]
    %v826 = vld [vmem:[%s11 + $0x78] sm:$0xff]
    %v827 = vld [vmem:[%s11 + $0x80] sm:$0xff]
    %v828 = vld [vmem:[%s11 + $0x88] sm:$0xff]
    %v829 = vld [vmem:[%s11 + $0x90] sm:$0xff]
    %v830 = vld [vmem:[%s11 + $0x98] sm:$0xff]
    %v831 = vld [vmem:[%s11 + $0xa0] sm:$0xff]
    %v832 = vld [vmem:[%s11 + $0xa8] sm:$0xff]
    %v833 = vld [vmem:[%s11 + $0xb0] sm:$0xff]
    %v834 = vld [vmem:[%s11 + $0xb8] sm:$0xff]
    %v835 = vld [vmem:[%s11 + $0xc0] sm:$0xf]
    %v836 = vld [vmem:[%s11 + $0xc8] sm:$0xf]
    %v837 = vld [vmem:[%s11 + $0xd0] sm:$0xf]
    %v838 = vld [vmem:[%s11 + $0xd8] sm:$0xf]
    %v839 = vld [vmem:[%s11 + $0xe0] sm:$0xf]
    %v840 = vld [vmem:[%s11 + $0xe8] sm:$0xf]
    %v842 = vsel %vm67, %v808, 0
    %v845 = vsel %vm71, %v835, 0
    %v848 = vsel %vm71, %v836, 0
    %v851 = vsel %vm71, %v837, 0
    %v854 = vsel %vm71, %v838, 0
    %v857 = vsel %vm71, %v839, 0
    %v860 = vsel %vm71, %v840, 0
    %862 = vmatprep.subr.mxu0 %v812
    %863 = vmatpush1.msra.mxu0 %v811
    %864 = vmatprep.subr.mxu0 %v818
    %865 = vmatpush1.msra.mxu0 %v817
    %866 = vmatprep.subr.mxu0 %v824
    %867 = vmatpush1.msra.mxu0 %v823
    %868 = vmatprep.subr.mxu0 %v830
    %869 = vmatpush1.msra.mxu0 %v829
    %870 = vmatprep.subr.mxu0 %v848
    %871 = vmatpush1.msra.mxu0 %v845
    %872 = vmatprep.subr.mxu0 0.0
    %873 = vmatpush1.msra.mxu0 0.0
    %874 = vmatprep.subr.mxu0 0.0
    %875 = vmatpush1.msra.mxu0 0.0
    %876 = vmatprep.subr.mxu0 0.0
    %877 = vmatpush1.msra.mxu0 0.0
    %878 = vmatprep.subr.mxu0 0.0
    %879 = vmatpush1.msra.mxu0 0.0
    %880 = vmatprep.subr.mxu0 0.0
    %881 = vmatpush1.msra.mxu0 0.0
    %882 = vmatprep.subr.mxu0 0.0
    %883 = vmatpush1.msra.mxu0 0.0
    %884 = vmatprep.subr.mxu0 0.0
    %885 = vmatpush1.msra.mxu0 0.0
    %886 = vmatprep.subr.mxu0 0.0
    %887 = vmatpush1.msra.mxu0 0.0
    %888 = vmatprep.subr.mxu0 0.0
    %889 = vmatpush1.msra.mxu0 0.0
    %890 = vmatprep.subr.mxu0 0.0
    %891 = vmatpush1.msra.mxu0 0.0
    %892 = vmatprep.subr.mxu0 0.0
    %893 = vmatpush1.msra.mxu0 0.0
    %894 = vmatprep.subr.mxu0 0.0
    %895 = vmatpush1.msra.mxu0 0.0
    %896 = vmatprep.subr.mxu0 0.0
    %897 = vmatpush1.msra.mxu0 0.0
    %898 = vmatprep.subr.mxu0 0.0
    %899 = vmatpush1.msra.mxu0 0.0
    %900 = vmatprep.subr.mxu0 0.0
    %901 = vmatpush1.msra.mxu0 0.0
    %902 = vmatprep.subr.mxu0 0.0
    %903 = vmatpush1.msra.mxu0 0.0
    %904 = vmatprep.subr.mxu0 0.0
    %905 = vmatpush1.msra.mxu0 0.0
    %906 = vmatprep.subr.mxu0 0.0
    %907 = vmatpush1.msra.mxu0 0.0
    %908 = vmatprep.subr.mxu0 0.0
    %909 = vmatpush1.msra.mxu0 0.0
    %910 = vmatprep.subr.mxu0 0.0
    %911 = vmatpush1.msra.mxu0 0.0
    %912 = vmatprep.subr.mxu0 0.0
    %913 = vmatpush1.msra.mxu0 0.0
    %914 = vmatprep.subr.mxu0 0.0
    %915 = vmatpush1.msra.mxu0 0.0
    %916 = vmatprep.subr.mxu0 0.0
    %917 = vmatpush1.msra.mxu0 0.0
    %918 = vmatprep.subr.mxu0 0.0
    %919 = vmatpush1.msra.mxu0 0.0
    %920 = vmatprep.subr.mxu0 0.0
    %921 = vmatpush1.msra.mxu0 0.0
    %922 = vmatprep.subr.mxu0 0.0
    %923 = vmatpush1.msra.mxu0 0.0
    %924 = vmatprep.subr.mxu0 0.0
    %925 = vmatpush1.msra.mxu0 0.0
    %926 = vmatprep.mubr.f32.mxu0 0.0
    %927 = vmatmul.mubr.f32.gmra.mrb[0].mxu0 %v842
    %v928 = vpop.f32.mrb[0].mxu0
    %v929 = vadd.f32 0.0, %v928
    %v930 = vpop.f32.mrb[0].mxu0
    %v931 = vadd.f32 0.0, %v930
    %932 = vdwg.mxu0
    %933 = vmatprep.subr.mxu0 %v814
    %934 = vmatpush1.msra.mxu0 %v813
    %935 = vmatprep.subr.mxu0 %v820
    %936 = vmatpush1.msra.mxu0 %v819
    %937 = vmatprep.subr.mxu0 %v826
    %938 = vmatpush1.msra.mxu0 %v825
    %939 = vmatprep.subr.mxu0 %v832
    %940 = vmatpush1.msra.mxu0 %v831
    %941 = vmatprep.subr.mxu0 %v854
    %942 = vmatpush1.msra.mxu0 %v851
    %943 = vmatprep.subr.mxu0 0.0
    %944 = vmatpush1.msra.mxu0 0.0
    %945 = vmatprep.subr.mxu0 0.0
    %946 = vmatpush1.msra.mxu0 0.0
    %947 = vmatprep.subr.mxu0 0.0
    %948 = vmatpush1.msra.mxu0 0.0
    %949 = vmatprep.subr.mxu0 0.0
    %950 = vmatpush1.msra.mxu0 0.0
    %951 = vmatprep.subr.mxu0 0.0
    %952 = vmatpush1.msra.mxu0 0.0
    %953 = vmatprep.subr.mxu0 0.0
    %954 = vmatpush1.msra.mxu0 0.0
    %955 = vmatprep.subr.mxu0 0.0
    %956 = vmatpush1.msra.mxu0 0.0
    %957 = vmatprep.subr.mxu0 0.0
    %958 = vmatpush1.msra.mxu0 0.0
    %959 = vmatprep.subr.mxu0 0.0
    %960 = vmatpush1.msra.mxu0 0.0
    %961 = vmatprep.subr.mxu0 0.0
    %962 = vmatpush1.msra.mxu0 0.0
    %963 = vmatprep.subr.mxu0 0.0
    %964 = vmatpush1.msra.mxu0 0.0
    %965 = vmatprep.subr.mxu0 0.0
    %966 = vmatpush1.msra.mxu0 0.0
    %967 = vmatprep.subr.mxu0 0.0
    %968 = vmatpush1.msra.mxu0 0.0
    %969 = vmatprep.subr.mxu0 0.0
    %970 = vmatpush1.msra.mxu0 0.0
    %971 = vmatprep.subr.mxu0 0.0
    %972 = vmatpush1.msra.mxu0 0.0
    %973 = vmatprep.subr.mxu0 0.0
    %974 = vmatpush1.msra.mxu0 0.0
    %975 = vmatprep.subr.mxu0 0.0
    %976 = vmatpush1.msra.mxu0 0.0
    %977 = vmatprep.subr.mxu0 0.0
    %978 = vmatpush1.msra.mxu0 0.0
    %979 = vmatprep.subr.mxu0 0.0
    %980 = vmatpush1.msra.mxu0 0.0
    %981 = vmatprep.subr.mxu0 0.0
    %982 = vmatpush1.msra.mxu0 0.0
    %983 = vmatprep.subr.mxu0 0.0
    %984 = vmatpush1.msra.mxu0 0.0
    %985 = vmatprep.subr.mxu0 0.0
    %986 = vmatpush1.msra.mxu0 0.0
    %987 = vmatprep.subr.mxu0 0.0
    %988 = vmatpush1.msra.mxu0 0.0
    %989 = vmatprep.subr.mxu0 0.0
    %990 = vmatpush1.msra.mxu0 0.0
    %991 = vmatprep.subr.mxu0 0.0
    %992 = vmatpush1.msra.mxu0 0.0
    %993 = vmatprep.subr.mxu0 0.0
    %994 = vmatpush1.msra.mxu0 0.0
    %995 = vmatprep.subr.mxu0 0.0
    %996 = vmatpush1.msra.mxu0 0.0
    %997 = vmatprep.mubr.f32.mxu0 0.0
    %998 = vmatmul.mubr.f32.gmra.mrb[0].mxu0 %v842
    %v999 = vpop.f32.mrb[0].mxu0
    %v1000 = vadd.f32 0.0, %v999
    %v1001 = vpop.f32.mrb[0].mxu0
    %v1002 = vadd.f32 0.0, %v1001
    %1003 = vdwg.mxu0
    %1004 = vmatprep.subr.mxu0 %v816
    %1005 = vmatpush1.msra.mxu0 %v815
    %1006 = vmatprep.subr.mxu0 %v822
    %1007 = vmatpush1.msra.mxu0 %v821
    %1008 = vmatprep.subr.mxu0 %v828
    %1009 = vmatpush1.msra.mxu0 %v827
    %1010 = vmatprep.subr.mxu0 %v834
    %1011 = vmatpush1.msra.mxu0 %v833
    %1012 = vmatprep.subr.mxu0 %v860
    %1013 = vmatpush1.msra.mxu0 %v857
    %1014 = vmatprep.subr.mxu0 0.0
    %1015 = vmatpush1.msra.mxu0 0.0
    %1016 = vmatprep.subr.mxu0 0.0
    %1017 = vmatpush1.msra.mxu0 0.0
    %1018 = vmatprep.subr.mxu0 0.0
    %1019 = vmatpush1.msra.mxu0 0.0
    %1020 = vmatprep.subr.mxu0 0.0
    %1021 = vmatpush1.msra.mxu0 0.0
    %1022 = vmatprep.subr.mxu0 0.0
    %1023 = vmatpush1.msra.mxu0 0.0
    %1024 = vmatprep.subr.mxu0 0.0
    %1025 = vmatpush1.msra.mxu0 0.0
    %1026 = vmatprep.subr.mxu0 0.0
    %1027 = vmatpush1.msra.mxu0 0.0
    %1028 = vmatprep.subr.mxu0 0.0
    %1029 = vmatpush1.msra.mxu0 0.0
    %1030 = vmatprep.subr.mxu0 0.0
    %1031 = vmatpush1.msra.mxu0 0.0
    %1032 = vmatprep.subr.mxu0 0.0
    %1033 = vmatpush1.msra.mxu0 0.0
    %1034 = vmatprep.subr.mxu0 0.0
    %1035 = vmatpush1.msra.mxu0 0.0
    %1036 = vmatprep.subr.mxu0 0.0
    %1037 = vmatpush1.msra.mxu0 0.0
    %1038 = vmatprep.subr.mxu0 0.0
    %1039 = vmatpush1.msra.mxu0 0.0
    %1040 = vmatprep.subr.mxu0 0.0
    %1041 = vmatpush1.msra.mxu0 0.0
    %1042 = vmatprep.subr.mxu0 0.0
    %1043 = vmatpush1.msra.mxu0 0.0
    %1044 = vmatprep.subr.mxu0 0.0
    %1045 = vmatpush1.msra.mxu0 0.0
    %1046 = vmatprep.subr.mxu0 0.0
    %1047 = vmatpush1.msra.mxu0 0.0
    %1048 = vmatprep.subr.mxu0 0.0
    %1049 = vmatpush1.msra.mxu0 0.0
    %1050 = vmatprep.subr.mxu0 0.0
    %1051 = vmatpush1.msra.mxu0 0.0
    %1052 = vmatprep.subr.mxu0 0.0
    %1053 = vmatpush1.msra.mxu0 0.0
    %1054 = vmatprep.subr.mxu0 0.0
    %1055 = vmatpush1.msra.mxu0 0.0
    %1056 = vmatprep.subr.mxu0 0.0
    %1057 = vmatpush1.msra.mxu0 0.0
    %1058 = vmatprep.subr.mxu0 0.0
    %1059 = vmatpush1.msra.mxu0 0.0
    %1060 = vmatprep.subr.mxu0 0.0
    %1061 = vmatpush1.msra.mxu0 0.0
    %1062 = vmatprep.subr.mxu0 0.0
    %1063 = vmatpush1.msra.mxu0 0.0
    %1064 = vmatprep.subr.mxu0 0.0
    %1065 = vmatpush1.msra.mxu0 0.0
    %1066 = vmatprep.subr.mxu0 0.0
    %1067 = vmatpush1.msra.mxu0 0.0
    %1068 = vmatprep.mubr.f32.mxu0 0.0
    %1069 = vmatmul.mubr.f32.gmra.mrb[0].mxu0 %v842
    %v1070 = vpop.f32.mrb[0].mxu0
    %v1071 = vadd.f32 0.0, %v1070
    %v1072 = vpop.f32.mrb[0].mxu0
    %v1073 = vadd.f32 0.0, %v1072
    %1074 = vdwg.mxu0
    %v1078 = vcombine.low %v929, %v931
    %v1080 = vunpack.c.l.s4 1983009808
    %v1081 = vunpack.c.0.s8 %v1080
    %v1082 = vlaneseq
    %v1083 = vshrl.u32 %v1082, 7
    %v1084 = vsub.s32 %v1081, %v1083
    %v1085 = vrot.slane %v1078, %v1084
    %v1087 = vunpack.c.l.s4 1983009808
    %v1088 = vunpack.c.0.s8 %v1087
    %v1089 = vlaneseq
    %v1090 = vshrl.u32 %v1089, 7
    %v1091 = vsub.s32 %v1088, %v1090
    %v1092 = vrot.slane %v1000, %v1091
    %v1093 = vcombine.low %v1085, %v1092
    %v1095 = vmul.f32 %v57, %v1093
    %v1099 = vcombine.low %v1002, %v1071
    %v1101 = vunpack.c.l.s4 1983009808
    %v1102 = vunpack.c.0.s8 %v1101
    %v1103 = vlaneseq
    %v1104 = vshrl.u32 %v1103, 7
    %v1105 = vsub.s32 %v1102, %v1104
    %v1106 = vrot.slane %v1099, %v1105
    %v1108 = vunpack.c.l.s4 1983009808
    %v1109 = vunpack.c.0.s8 %v1108
    %v1110 = vlaneseq
    %v1111 = vshrl.u32 %v1110, 7
    %v1112 = vsub.s32 %v1109, %v1111
    %v1113 = vrot.slane %v1073, %v1112
    %v1114 = vcombine.low %v1106, %v1113
    %v1116 = vmul.f32 %v1095, %v1114
    %v1117 = vld [vmem:[%s12] sm:$0xff]
    %v1118 = vld [vmem:[%s12 + $0x8] sm:$0xff]
    %v1119 = vld [vmem:[%s12 + $0x10] sm:$0xff]
    %v1120 = vld [vmem:[%s12 + $0x18] sm:$0xff]
    %v1121 = vld [vmem:[%s12 + $0x20] sm:$0xff]
    %v1122 = vld [vmem:[%s12 + $0x28] sm:$0xff]
    %v1123 = vld [vmem:[%s12 + $0x30] sm:$0xff]
    %v1124 = vld [vmem:[%s12 + $0x38] sm:$0xff]
    %v1125 = vld [vmem:[%s12 + $0x40] sm:$0xff]
    %v1126 = vld [vmem:[%s12 + $0x48] sm:$0xff]
    %v1127 = vld [vmem:[%s12 + $0x50] sm:$0xff]
    %v1128 = vld [vmem:[%s12 + $0x58] sm:$0xff]
    %v1129 = vld [vmem:[%s12 + $0x60] sm:$0xff]
    %v1130 = vld [vmem:[%s12 + $0x68] sm:$0xff]
    %v1131 = vld [vmem:[%s12 + $0x70] sm:$0xff]
    %v1132 = vld [vmem:[%s12 + $0x78] sm:$0xff]
    %v1133 = vld [vmem:[%s12 + $0x80] sm:$0xff]
    %v1134 = vld [vmem:[%s12 + $0x88] sm:$0xff]
    %v1135 = vld [vmem:[%s12 + $0x90] sm:$0xff]
    %v1136 = vld [vmem:[%s12 + $0x98] sm:$0xff]
    %v1137 = vld [vmem:[%s12 + $0xa0] sm:$0xff]
    %v1138 = vld [vmem:[%s12 + $0xa8] sm:$0xff]
    %v1139 = vld [vmem:[%s12 + $0xb0] sm:$0xff]
    %v1140 = vld [vmem:[%s12 + $0xb8] sm:$0xff]
    %v1141 = vld [vmem:[%s12 + $0xc0] sm:$0xff]
    %v1142 = vld [vmem:[%s12 + $0xc8] sm:$0xff]
    %v1143 = vld [vmem:[%s12 + $0xd0] sm:$0xff]
    %v1144 = vld [vmem:[%s12 + $0xd8] sm:$0xff]
    %v1145 = vld [vmem:[%s12 + $0xe0] sm:$0xff]
    %v1146 = vld [vmem:[%s12 + $0xe8] sm:$0xff]
    %v1147 = vld [vmem:[%s12 + $0xf0] sm:$0xff]
    %v1148 = vld [vmem:[%s12 + $0xf8] sm:$0xff]
    %v1149 = vld [vmem:[%s12 + $0x100] sm:$0xff]
    %v1150 = vld [vmem:[%s12 + $0x108] sm:$0xff]
    %v1151 = vld [vmem:[%s12 + $0x110] sm:$0xff]
    %v1152 = vld [vmem:[%s12 + $0x118] sm:$0xff]
    %v1153 = vld [vmem:[%s12 + $0x120] sm:$0xff]
    %v1154 = vld [vmem:[%s12 + $0x128] sm:$0xff]
    %v1155 = vld [vmem:[%s12 + $0x130] sm:$0xff]
    %v1156 = vld [vmem:[%s12 + $0x138] sm:$0xff]
    %v1157 = vld [vmem:[%s12 + $0x140] sm:$0xff]
    %v1158 = vld [vmem:[%s12 + $0x148] sm:$0xff]
    %v1159 = vld [vmem:[%s12 + $0x150] sm:$0xff]
    %v1160 = vld [vmem:[%s12 + $0x158] sm:$0xff]
    %v1161 = vld [vmem:[%s12 + $0x160] sm:$0xff]
    %v1162 = vld [vmem:[%s12 + $0x168] sm:$0xff]
    %v1163 = vld [vmem:[%s12 + $0x170] sm:$0xff]
    %v1164 = vld [vmem:[%s12 + $0x178] sm:$0xff]
    %v1165 = vld [vmem:[%s13] sm:$0x1]
    %v1167 = vlaneseq
    %v1168 = vshrl.u32 %v1167, 7
    %v1169 = vsub.s32 0, %v1168
    %v1170 = vrot.slane %v1165, %v1169
    %v1173 = vcombine.high %v1116, %v1116
    %v1175 = vunpack.c.l.s4 1983009808
    %v1176 = vunpack.c.0.s8 %v1175
    %v1177 = vlaneseq
    %v1178 = vshrl.u32 %v1177, 7
    %v1179 = vsub.s32 %v1176, %v1178
    %v1180 = vrot.slane %v1116, %v1179
    %v1182 = vunpack.c.l.s4 1983009808
    %v1183 = vunpack.c.0.s8 %v1182
    %v1184 = vlaneseq
    %v1185 = vshrl.u32 %v1184, 7
    %v1186 = vsub.s32 %v1183, %v1185
    %v1187 = vrot.slane %v1173, %v1186
    %v1188 = vcombine.high %v1180, %v1180
    %1192 = vmatprep.subr.mxu0 0.0
    %1193 = vmatpush1.msra.mxu0 %v1117
    %1194 = vmatprep.subr.mxu0 0.0
    %1195 = vmatpush1.msra.mxu0 %v1118
    %1196 = vmatprep.subr.mxu0 0.0
    %1197 = vmatpush1.msra.mxu0 %v1119
    %1198 = vmatprep.subr.mxu0 0.0
    %1199 = vmatpush1.msra.mxu0 %v1120
    %1200 = vmatprep.subr.mxu0 0.0
    %1201 = vmatpush1.msra.mxu0 %v1121
    %1202 = vmatprep.subr.mxu0 0.0
    %1203 = vmatpush1.msra.mxu0 %v1122
    %1204 = vmatprep.subr.mxu0 0.0
    %1205 = vmatpush1.msra.mxu0 %v1123
    %1206 = vmatprep.subr.mxu0 0.0
    %1207 = vmatpush1.msra.mxu0 %v1124
    %1208 = vmatprep.subr.mxu0 0.0
    %1209 = vmatpush1.msra.mxu0 %v1125
    %1210 = vmatprep.subr.mxu0 0.0
    %1211 = vmatpush1.msra.mxu0 %v1126
    %1212 = vmatprep.subr.mxu0 0.0
    %1213 = vmatpush1.msra.mxu0 %v1127
    %1214 = vmatprep.subr.mxu0 0.0
    %1215 = vmatpush1.msra.mxu0 %v1128
    %1216 = vmatprep.subr.mxu0 0.0
    %1217 = vmatpush1.msra.mxu0 %v1129
    %1218 = vmatprep.subr.mxu0 0.0
    %1219 = vmatpush1.msra.mxu0 %v1130
    %1220 = vmatprep.subr.mxu0 0.0
    %1221 = vmatpush1.msra.mxu0 %v1131
    %1222 = vmatprep.subr.mxu0 0.0
    %1223 = vmatpush1.msra.mxu0 %v1132
    %1224 = vmatprep.subr.mxu0 0.0
    %1225 = vmatpush1.msra.mxu0 %v1133
    %1226 = vmatprep.subr.mxu0 0.0
    %1227 = vmatpush1.msra.mxu0 %v1134
    %1228 = vmatprep.subr.mxu0 0.0
    %1229 = vmatpush1.msra.mxu0 %v1135
    %1230 = vmatprep.subr.mxu0 0.0
    %1231 = vmatpush1.msra.mxu0 %v1136
    %1232 = vmatprep.subr.mxu0 0.0
    %1233 = vmatpush1.msra.mxu0 %v1137
    %1234 = vmatprep.subr.mxu0 0.0
    %1235 = vmatpush1.msra.mxu0 %v1138
    %1236 = vmatprep.subr.mxu0 0.0
    %1237 = vmatpush1.msra.mxu0 %v1139
    %1238 = vmatprep.subr.mxu0 0.0
    %1239 = vmatpush1.msra.mxu0 %v1140
    %1240 = vmatprep.subr.mxu0 0.0
    %1241 = vmatpush1.msra.mxu0 %v1141
    %1242 = vmatprep.subr.mxu0 0.0
    %1243 = vmatpush1.msra.mxu0 %v1142
    %1244 = vmatprep.subr.mxu0 0.0
    %1245 = vmatpush1.msra.mxu0 %v1143
    %1246 = vmatprep.subr.mxu0 0.0
    %1247 = vmatpush1.msra.mxu0 %v1144
    %1248 = vmatprep.subr.mxu0 0.0
    %1249 = vmatpush1.msra.mxu0 %v1145
    %1250 = vmatprep.subr.mxu0 0.0
    %1251 = vmatpush1.msra.mxu0 %v1146
    %1252 = vmatprep.subr.mxu0 0.0
    %1253 = vmatpush1.msra.mxu0 %v1147
    %1254 = vmatprep.subr.mxu0 0.0
    %1255 = vmatpush1.msra.mxu0 %v1148
    %1256 = vmatprep.mubr.f32.mxu0 %v1188
    %1257 = vmatmul.mubr.f32.gmra.mrb[0].mxu0 %v1180
    %v1258 = vpop.f32.mrb[0].mxu0
    %v1259 = vadd.f32 %v1170, %v1258
    %v1260 = vpop.f32.mrb[0].mxu0
    %1261 = vdwg.mxu0
    %1262 = vmatprep.subr.mxu0 0.0
    %1263 = vmatpush1.msra.mxu0 %v1149
    %1264 = vmatprep.subr.mxu0 0.0
    %1265 = vmatpush1.msra.mxu0 %v1150
    %1266 = vmatprep.subr.mxu0 0.0
    %1267 = vmatpush1.msra.mxu0 %v1151
    %1268 = vmatprep.subr.mxu0 0.0
    %1269 = vmatpush1.msra.mxu0 %v1152
    %1270 = vmatprep.subr.mxu0 0.0
    %1271 = vmatpush1.msra.mxu0 %v1153
    %1272 = vmatprep.subr.mxu0 0.0
    %1273 = vmatpush1.msra.mxu0 %v1154
    %1274 = vmatprep.subr.mxu0 0.0
    %1275 = vmatpush1.msra.mxu0 %v1155
    %1276 = vmatprep.subr.mxu0 0.0
    %1277 = vmatpush1.msra.mxu0 %v1156
    %1278 = vmatprep.subr.mxu0 0.0
    %1279 = vmatpush1.msra.mxu0 %v1157
    %1280 = vmatprep.subr.mxu0 0.0
    %1281 = vmatpush1.msra.mxu0 %v1158
    %1282 = vmatprep.subr.mxu0 0.0
    %1283 = vmatpush1.msra.mxu0 %v1159
    %1284 = vmatprep.subr.mxu0 0.0
    %1285 = vmatpush1.msra.mxu0 %v1160
    %1286 = vmatprep.subr.mxu0 0.0
    %1287 = vmatpush1.msra.mxu0 %v1161
    %1288 = vmatprep.subr.mxu0 0.0
    %1289 = vmatpush1.msra.mxu0 %v1162
    %1290 = vmatprep.subr.mxu0 0.0
    %1291 = vmatpush1.msra.mxu0 %v1163
    %1292 = vmatprep.subr.mxu0 0.0
    %1293 = vmatpush1.msra.mxu0 %v1164
    %1294 = vmatprep.subr.mxu0 0.0
    %1295 = vmatpush1.msra.mxu0 0.0
    %1296 = vmatprep.subr.mxu0 0.0
    %1297 = vmatpush1.msra.mxu0 0.0
    %1298 = vmatprep.subr.mxu0 0.0
    %1299 = vmatpush1.msra.mxu0 0.0
    %1300 = vmatprep.subr.mxu0 0.0
    %1301 = vmatpush1.msra.mxu0 0.0
    %1302 = vmatprep.subr.mxu0 0.0
    %1303 = vmatpush1.msra.mxu0 0.0
    %1304 = vmatprep.subr.mxu0 0.0
    %1305 = vmatpush1.msra.mxu0 0.0
    %1306 = vmatprep.subr.mxu0 0.0
    %1307 = vmatpush1.msra.mxu0 0.0
    %1308 = vmatprep.subr.mxu0 0.0
    %1309 = vmatpush1.msra.mxu0 0.0
    %1310 = vmatprep.subr.mxu0 0.0
    %1311 = vmatpush1.msra.mxu0 0.0
    %1312 = vmatprep.subr.mxu0 0.0
    %1313 = vmatpush1.msra.mxu0 0.0
    %1314 = vmatprep.subr.mxu0 0.0
    %1315 = vmatpush1.msra.mxu0 0.0
    %1316 = vmatprep.subr.mxu0 0.0
    %1317 = vmatpush1.msra.mxu0 0.0
    %1318 = vmatprep.subr.mxu0 0.0
    %1319 = vmatpush1.msra.mxu0 0.0
    %1320 = vmatprep.subr.mxu0 0.0
    %1321 = vmatpush1.msra.mxu0 0.0
    %1322 = vmatprep.subr.mxu0 0.0
    %1323 = vmatpush1.msra.mxu0 0.0
    %1324 = vmatprep.subr.mxu0 0.0
    %1325 = vmatpush1.msra.mxu0 0.0
    %1326 = vmatprep.mubr.f32.mxu0 0.0
    %1327 = vmatmul.mubr.f32.gmra.mrb[0].mxu0 %v1187
    %v1328 = vpop.f32.mrb[0].mxu0
    %v1329 = vadd.f32 %v1259, %v1328
    %v1330 = vpop.f32.mrb[0].mxu0
    %1331 = vdwg.mxu0
    %v1332 = vsub.f32 0.0, %v1329
    %v1333 = vmul.f32 %v1332, 1.442695
    %v1334 = vpow.pop %v1333
    %v1335 = vadd.f32 %v1334, 1.0
    %v1336 = vrcp.pop %v1335
    %v1337 = vmul.f32 %v1329, %v1336
    %v1338 = vld [vmem:[%s14] sm:$0xff]
    %v1339 = vld [vmem:[%s14 + $0x8] sm:$0xf]
    %v1342 = vcombine.high %v1338, %v1338
    %vm1343 = vcmask 31744
    %v1345 = vsel %vm1343, %v1337, 0
    %v1347 = vsel %vm71, %v1338, 0
    %v1349 = vsel %vm71, %v1342, 0
    %v1351 = vsel %vm71, %v1339, 0
    %1353 = vmatprep.subr.mxu0 %v1349
    %1354 = vmatpush1.msra.mxu0 %v1347
    %1355 = vmatprep.subr.mxu0 0.0
    %1356 = vmatpush1.msra.mxu0 0.0
    %1357 = vmatprep.subr.mxu0 0.0
    %1358 = vmatpush1.msra.mxu0 0.0
    %1359 = vmatprep.subr.mxu0 0.0
    %1360 = vmatpush1.msra.mxu0 0.0
    %1361 = vmatprep.subr.mxu0 0.0
    %1362 = vmatpush1.msra.mxu0 0.0
    %1363 = vmatprep.subr.mxu0 0.0
    %1364 = vmatpush1.msra.mxu0 0.0
    %1365 = vmatprep.subr.mxu0 0.0
    %1366 = vmatpush1.msra.mxu0 0.0
    %1367 = vmatprep.subr.mxu0 0.0
    %1368 = vmatpush1.msra.mxu0 0.0
    %1369 = vmatprep.subr.mxu0 0.0
    %1370 = vmatpush1.msra.mxu0 0.0
    %1371 = vmatprep.subr.mxu0 0.0
    %1372 = vmatpush1.msra.mxu0 0.0
    %1373 = vmatprep.subr.mxu0 0.0
    %1374 = vmatpush1.msra.mxu0 0.0
    %1375 = vmatprep.subr.mxu0 0.0
    %1376 = vmatpush1.msra.mxu0 0.0
    %1377 = vmatprep.subr.mxu0 0.0
    %1378 = vmatpush1.msra.mxu0 0.0
    %1379 = vmatprep.subr.mxu0 0.0
    %1380 = vmatpush1.msra.mxu0 0.0
    %1381 = vmatprep.subr.mxu0 0.0
    %1382 = vmatpush1.msra.mxu0 0.0
    %1383 = vmatprep.subr.mxu0 0.0
    %1384 = vmatpush1.msra.mxu0 0.0
    %1385 = vmatprep.subr.mxu0 0.0
    %1386 = vmatpush1.msra.mxu0 0.0
    %1387 = vmatprep.subr.mxu0 0.0
    %1388 = vmatpush1.msra.mxu0 0.0
    %1389 = vmatprep.subr.mxu0 0.0
    %1390 = vmatpush1.msra.mxu0 0.0
    %1391 = vmatprep.subr.mxu0 0.0
    %1392 = vmatpush1.msra.mxu0 0.0
    %1393 = vmatprep.subr.mxu0 0.0
    %1394 = vmatpush1.msra.mxu0 0.0
    %1395 = vmatprep.subr.mxu0 0.0
    %1396 = vmatpush1.msra.mxu0 0.0
    %1397 = vmatprep.subr.mxu0 0.0
    %1398 = vmatpush1.msra.mxu0 0.0
    %1399 = vmatprep.subr.mxu0 0.0
    %1400 = vmatpush1.msra.mxu0 0.0
    %1401 = vmatprep.subr.mxu0 0.0
    %1402 = vmatpush1.msra.mxu0 0.0
    %1403 = vmatprep.subr.mxu0 0.0
    %1404 = vmatpush1.msra.mxu0 0.0
    %1405 = vmatprep.subr.mxu0 0.0
    %1406 = vmatpush1.msra.mxu0 0.0
    %1407 = vmatprep.subr.mxu0 0.0
    %1408 = vmatpush1.msra.mxu0 0.0
    %1409 = vmatprep.subr.mxu0 0.0
    %1410 = vmatpush1.msra.mxu0 0.0
    %1411 = vmatprep.subr.mxu0 0.0
    %1412 = vmatpush1.msra.mxu0 0.0
    %1413 = vmatprep.subr.mxu0 0.0
    %1414 = vmatpush1.msra.mxu0 0.0
    %1415 = vmatprep.subr.mxu0 0.0
    %1416 = vmatpush1.msra.mxu0 0.0
    %1417 = vmatprep.mubr.f32.mxu0 0.0
    %1418 = vmatmul.mubr.f32.gmra.mrb[0].mxu0 %v1345
    %v1419 = vpop.f32.mrb[0].mxu0
    %v1420 = vadd.f32 0.0, %v1419
    %v1421 = vpop.f32.mrb[0].mxu0
    %v1422 = vadd.f32 0.0, %v1421
    %1423 = vdwg.mxu0
    %1424 = vmatprep.subr.mxu0 0.0
    %1425 = vmatpush1.msra.mxu0 %v1351
    %1426 = vmatprep.subr.mxu0 0.0
    %1427 = vmatpush1.msra.mxu0 0.0
    %1428 = vmatprep.subr.mxu0 0.0
    %1429 = vmatpush1.msra.mxu0 0.0
    %1430 = vmatprep.subr.mxu0 0.0
    %1431 = vmatpush1.msra.mxu0 0.0
    %1432 = vmatprep.subr.mxu0 0.0
    %1433 = vmatpush1.msra.mxu0 0.0
    %1434 = vmatprep.subr.mxu0 0.0
    %1435 = vmatpush1.msra.mxu0 0.0
    %1436 = vmatprep.subr.mxu0 0.0
    %1437 = vmatpush1.msra.mxu0 0.0
    %1438 = vmatprep.subr.mxu0 0.0
    %1439 = vmatpush1.msra.mxu0 0.0
    %1440 = vmatprep.subr.mxu0 0.0
    %1441 = vmatpush1.msra.mxu0 0.0
    %1442 = vmatprep.subr.mxu0 0.0
    %1443 = vmatpush1.msra.mxu0 0.0
    %1444 = vmatprep.subr.mxu0 0.0
    %1445 = vmatpush1.msra.mxu0 0.0
    %1446 = vmatprep.subr.mxu0 0.0
    %1447 = vmatpush1.msra.mxu0 0.0
    %1448 = vmatprep.subr.mxu0 0.0
    %1449 = vmatpush1.msra.mxu0 0.0
    %1450 = vmatprep.subr.mxu0 0.0
    %1451 = vmatpush1.msra.mxu0 0.0
    %1452 = vmatprep.subr.mxu0 0.0
    %1453 = vmatpush1.msra.mxu0 0.0
    %1454 = vmatprep.subr.mxu0 0.0
    %1455 = vmatpush1.msra.mxu0 0.0
    %1456 = vmatprep.subr.mxu0 0.0
    %1457 = vmatpush1.msra.mxu0 0.0
    %1458 = vmatprep.subr.mxu0 0.0
    %1459 = vmatpush1.msra.mxu0 0.0
    %1460 = vmatprep.subr.mxu0 0.0
    %1461 = vmatpush1.msra.mxu0 0.0
    %1462 = vmatprep.subr.mxu0 0.0
    %1463 = vmatpush1.msra.mxu0 0.0
    %1464 = vmatprep.subr.mxu0 0.0
    %1465 = vmatpush1.msra.mxu0 0.0
    %1466 = vmatprep.subr.mxu0 0.0
    %1467 = vmatpush1.msra.mxu0 0.0
    %1468 = vmatprep.subr.mxu0 0.0
    %1469 = vmatpush1.msra.mxu0 0.0
    %1470 = vmatprep.subr.mxu0 0.0
    %1471 = vmatpush1.msra.mxu0 0.0
    %1472 = vmatprep.subr.mxu0 0.0
    %1473 = vmatpush1.msra.mxu0 0.0
    %1474 = vmatprep.subr.mxu0 0.0
    %1475 = vmatpush1.msra.mxu0 0.0
    %1476 = vmatprep.subr.mxu0 0.0
    %1477 = vmatpush1.msra.mxu0 0.0
    %1478 = vmatprep.subr.mxu0 0.0
    %1479 = vmatpush1.msra.mxu0 0.0
    %1480 = vmatprep.subr.mxu0 0.0
    %1481 = vmatpush1.msra.mxu0 0.0
    %1482 = vmatprep.subr.mxu0 0.0
    %1483 = vmatpush1.msra.mxu0 0.0
    %1484 = vmatprep.subr.mxu0 0.0
    %1485 = vmatpush1.msra.mxu0 0.0
    %1486 = vmatprep.subr.mxu0 0.0
    %1487 = vmatpush1.msra.mxu0 0.0
    %1488 = vmatprep.mubr.f32.mxu0 0.0
    %1489 = vmatmul.mubr.f32.gmra.mrb[0].mxu0 %v1345
    %v1490 = vpop.f32.mrb[0].mxu0
    %v1491 = vadd.f32 0.0, %v1490
    %v1492 = vpop.f32.mrb[0].mxu0
    %1493 = vdwg.mxu0
    %s1494 = scalar_lea.vmem %s15, 3
    %v1495 = vld [vmem:[%s1494] ss:$8 sm:$0x7]
    %v1497 = vlaneseq
    %v1498 = vshrl.u32 %v1497, 7
    %v1499 = vsub.s32 0, %v1498
    %v1500 = vrot.slane %v1495, %v1499
    %v1501 = vlaneseq
    %v1502 = vshrl.u32 %v1501, 7
    %v1503 = vsub.s32 1, %v1502
    %v1504 = vrot.slane %v1495, %v1503
    %v1505 = vlaneseq
    %v1506 = vshrl.u32 %v1505, 7
    %v1507 = vsub.s32 2, %v1506
    %v1508 = vrot.slane %v1495, %v1507
    %v1513 = vcombine.high %v57, %v57
    %v1515 = vunpack.c.l.s4 1983009808
    %v1516 = vunpack.c.0.s8 %v1515
    %v1517 = vlaneseq
    %v1518 = vshrl.u32 %v1517, 7
    %v1519 = vsub.s32 %v1516, %v1518
    %v1520 = vrot.slane %v57, %v1519
    %v1522 = vunpack.c.l.s4 1983009808
    %v1523 = vunpack.c.0.s8 %v1522
    %v1524 = vlaneseq
    %v1525 = vshrl.u32 %v1524, 7
    %v1526 = vsub.s32 %v1523, %v1525
    %v1527 = vrot.slane %v1513, %v1526
    %v1528 = vcombine.high %v1520, %v1520
    %v1532 = vmul.f32 %v1500, %v1520
    %v1533 = vmul.f32 %v1504, %v1528
    %v1534 = vmul.f32 %v1508, %v1527
    %v1535 = vld [vmem:[%s15] ss:$8 sm:$0x7]
    %1536 = vrot.lane.b32.xlu0 %v1520, 125
    %v1537 = vpop.permute.xlu0 %1536
    %1538 = vrot.lane.b32.xlu0 %v1528, 125
    %v1539 = vpop.permute.xlu0 %1538
    %1540 = vrot.lane.b32.xlu0 %v1527, 125
    %v1541 = vpop.permute.xlu0 %1540
    %v1542 = vlaneseq
    %v1543 = vand.u32 %v1542, 127
    %vm1544 = vcmp.lt.s32.totalorder %v1543, 125
    %v1545 = vsel %vm1544, %v1539, %v1541
    %v1546 = vsel %vm1544, %v1537, %v1539
    %v1547 = vsel %vm1544, %v1541, %v1537
    %v1549 = vlaneseq
    %v1550 = vshrl.u32 %v1549, 7
    %v1551 = vsub.s32 0, %v1550
    %v1552 = vrot.slane %v1535, %v1551
    %v1553 = vlaneseq
    %v1554 = vshrl.u32 %v1553, 7
    %v1555 = vsub.s32 1, %v1554
    %v1556 = vrot.slane %v1535, %v1555
    %v1557 = vlaneseq
    %v1558 = vshrl.u32 %v1557, 7
    %v1559 = vsub.s32 2, %v1558
    %v1560 = vrot.slane %v1535, %v1559
    %v1564 = vmul.f32 %v1552, %v1546
    %v1565 = vmul.f32 %v1556, %v1545
    %v1566 = vmul.f32 %v1560, %v1547
    %v1567 = vadd.f32 %v1532, %v1564
    %v1568 = vadd.f32 %v1533, %v1565
    %v1569 = vadd.f32 %v1534, %v1566
    %s1570 = scalar_lea.vmem %s15, 1
    %v1571 = vld [vmem:[%s1570] ss:$8 sm:$0x7]
    %1572 = vrot.lane.b32.xlu0 %v1520, 126
    %v1573 = vpop.permute.xlu0 %1572
    %1574 = vrot.lane.b32.xlu0 %v1528, 126
    %v1575 = vpop.permute.xlu0 %1574
    %1576 = vrot.lane.b32.xlu0 %v1527, 126
    %v1577 = vpop.permute.xlu0 %1576
    %vm1578 = vcmp.lt.s32.totalorder %v1543, 126
    %v1579 = vsel %vm1578, %v1575, %v1577
    %v1580 = vsel %vm1578, %v1573, %v1575
    %v1581 = vsel %vm1578, %v1577, %v1573
    %v1583 = vlaneseq
    %v1584 = vshrl.u32 %v1583, 7
    %v1585 = vsub.s32 0, %v1584
    %v1586 = vrot.slane %v1571, %v1585
    %v1587 = vlaneseq
    %v1588 = vshrl.u32 %v1587, 7
    %v1589 = vsub.s32 1, %v1588
    %v1590 = vrot.slane %v1571, %v1589
    %v1591 = vlaneseq
    %v1592 = vshrl.u32 %v1591, 7
    %v1593 = vsub.s32 2, %v1592
    %v1594 = vrot.slane %v1571, %v1593
    %v1598 = vmul.f32 %v1586, %v1580
    %v1599 = vmul.f32 %v1590, %v1579
    %v1600 = vmul.f32 %v1594, %v1581
    %v1601 = vadd.f32 %v1567, %v1598
    %v1602 = vadd.f32 %v1568, %v1599
    %v1603 = vadd.f32 %v1569, %v1600
    %s1604 = scalar_lea.vmem %s15, 2
    %v1605 = vld [vmem:[%s1604] ss:$8 sm:$0x7]
    %1606 = vrot.lane.b32.xlu0 %v1520, 127
    %v1607 = vpop.permute.xlu0 %1606
    %1608 = vrot.lane.b32.xlu0 %v1528, 127
    %v1609 = vpop.permute.xlu0 %1608
    %1610 = vrot.lane.b32.xlu0 %v1527, 127
    %v1611 = vpop.permute.xlu0 %1610
    %vm1612 = vcmp.lt.s32.totalorder %v1543, 127
    %v1613 = vsel %vm1612, %v1609, %v1611
    %v1614 = vsel %vm1612, %v1607, %v1609
    %v1615 = vsel %vm1612, %v1611, %v1607
    %v1617 = vlaneseq
    %v1618 = vshrl.u32 %v1617, 7
    %v1619 = vsub.s32 0, %v1618
    %v1620 = vrot.slane %v1605, %v1619
    %v1621 = vlaneseq
    %v1622 = vshrl.u32 %v1621, 7
    %v1623 = vsub.s32 1, %v1622
    %v1624 = vrot.slane %v1605, %v1623
    %v1625 = vlaneseq
    %v1626 = vshrl.u32 %v1625, 7
    %v1627 = vsub.s32 2, %v1626
    %v1628 = vrot.slane %v1605, %v1627
    %v1632 = vmul.f32 %v1620, %v1614
    %v1633 = vmul.f32 %v1624, %v1613
    %v1634 = vmul.f32 %v1628, %v1615
    %v1635 = vadd.f32 %v1601, %v1632
    %v1636 = vadd.f32 %v1602, %v1633
    %v1637 = vadd.f32 %v1603, %v1634
    %s1638 = scalar_lea.vmem %s15, 4
    %v1639 = vld [vmem:[%s1638] ss:$8 sm:$0x7]
    %1640 = vrot.lane.b32.xlu0 %v1520, 1
    %v1641 = vpop.permute.xlu0 %1640
    %1642 = vrot.lane.b32.xlu0 %v1528, 1
    %v1643 = vpop.permute.xlu0 %1642
    %1644 = vrot.lane.b32.xlu0 %v1527, 1
    %v1645 = vpop.permute.xlu0 %1644
    %vm1646 = vcmp.lt.s32.totalorder %v1543, 1
    %v1647 = vsel %vm1646, %v1643, %v1645
    %v1648 = vsel %vm1646, %v1641, %v1643
    %v1649 = vsel %vm1646, %v1645, %v1641
    %v1651 = vlaneseq
    %v1652 = vshrl.u32 %v1651, 7
    %v1653 = vsub.s32 0, %v1652
    %v1654 = vrot.slane %v1639, %v1653
    %v1655 = vlaneseq
    %v1656 = vshrl.u32 %v1655, 7
    %v1657 = vsub.s32 1, %v1656
    %v1658 = vrot.slane %v1639, %v1657
    %v1659 = vlaneseq
    %v1660 = vshrl.u32 %v1659, 7
    %v1661 = vsub.s32 2, %v1660
    %v1662 = vrot.slane %v1639, %v1661
    %v1666 = vmul.f32 %v1654, %v1649
    %v1667 = vmul.f32 %v1658, %v1648
    %v1668 = vmul.f32 %v1662, %v1647
    %v1669 = vadd.f32 %v1635, %v1666
    %v1670 = vadd.f32 %v1636, %v1667
    %v1671 = vadd.f32 %v1637, %v1668
    %s1672 = scalar_lea.vmem %s15, 5
    %v1673 = vld [vmem:[%s1672] ss:$8 sm:$0x7]
    %1674 = vrot.lane.b32.xlu0 %v1520, 2
    %v1675 = vpop.permute.xlu0 %1674
    %1676 = vrot.lane.b32.xlu0 %v1528, 2
    %v1677 = vpop.permute.xlu0 %1676
    %1678 = vrot.lane.b32.xlu0 %v1527, 2
    %v1679 = vpop.permute.xlu0 %1678
    %vm1680 = vcmp.lt.s32.totalorder %v1543, 2
    %v1681 = vsel %vm1680, %v1677, %v1679
    %v1682 = vsel %vm1680, %v1675, %v1677
    %v1683 = vsel %vm1680, %v1679, %v1675
    %v1685 = vlaneseq
    %v1686 = vshrl.u32 %v1685, 7
    %v1687 = vsub.s32 0, %v1686
    %v1688 = vrot.slane %v1673, %v1687
    %v1689 = vlaneseq
    %v1690 = vshrl.u32 %v1689, 7
    %v1691 = vsub.s32 1, %v1690
    %v1692 = vrot.slane %v1673, %v1691
    %v1693 = vlaneseq
    %v1694 = vshrl.u32 %v1693, 7
    %v1695 = vsub.s32 2, %v1694
    %v1696 = vrot.slane %v1673, %v1695
    %v1700 = vmul.f32 %v1688, %v1683
    %v1701 = vmul.f32 %v1692, %v1682
    %v1702 = vmul.f32 %v1696, %v1681
    %v1703 = vadd.f32 %v1669, %v1700
    %v1704 = vadd.f32 %v1670, %v1701
    %v1705 = vadd.f32 %v1671, %v1702
    %s1706 = scalar_lea.vmem %s15, 6
    %v1707 = vld [vmem:[%s1706] ss:$8 sm:$0x7]
    %1708 = vrot.lane.b32.xlu0 %v1520, 3
    %v1709 = vpop.permute.xlu0 %1708
    %1710 = vrot.lane.b32.xlu0 %v1528, 3
    %v1711 = vpop.permute.xlu0 %1710
    %1712 = vrot.lane.b32.xlu0 %v1527, 3
    %v1713 = vpop.permute.xlu0 %1712
    %vm1714 = vcmp.lt.s32.totalorder %v1543, 3
    %v1715 = vsel %vm1714, %v1711, %v1713
    %v1716 = vsel %vm1714, %v1709, %v1711
    %v1717 = vsel %vm1714, %v1713, %v1709
    %v1719 = vlaneseq
    %v1720 = vshrl.u32 %v1719, 7
    %v1721 = vsub.s32 0, %v1720
    %v1722 = vrot.slane %v1707, %v1721
    %v1723 = vlaneseq
    %v1724 = vshrl.u32 %v1723, 7
    %v1725 = vsub.s32 1, %v1724
    %v1726 = vrot.slane %v1707, %v1725
    %v1727 = vlaneseq
    %v1728 = vshrl.u32 %v1727, 7
    %v1729 = vsub.s32 2, %v1728
    %v1730 = vrot.slane %v1707, %v1729
    %v1734 = vmul.f32 %v1722, %v1717
    %v1735 = vmul.f32 %v1726, %v1716
    %v1736 = vmul.f32 %v1730, %v1715
    %v1737 = vadd.f32 %v1703, %v1734
    %v1738 = vadd.f32 %v1704, %v1735
    %v1739 = vadd.f32 %v1705, %v1736
    %v1740 = vmul.f32 %v1737, %v1420
    %v1741 = vmul.f32 %v1738, %v1422
    %v1742 = vmul.f32 %v1739, %v1491
    %v1746 = vcombine.low %v1740, %v1741
    %v1748 = vunpack.c.l.s4 1983009808
    %v1749 = vunpack.c.0.s8 %v1748
    %v1750 = vlaneseq
    %v1751 = vshrl.u32 %v1750, 7
    %v1752 = vsub.s32 %v1749, %v1751
    %v1753 = vrot.slane %v1746, %v1752
    %v1755 = vunpack.c.l.s4 1983009808
    %v1756 = vunpack.c.0.s8 %v1755
    %v1757 = vlaneseq
    %v1758 = vshrl.u32 %v1757, 7
    %v1759 = vsub.s32 %v1756, %v1758
    %v1760 = vrot.slane %v1742, %v1759
    %v1761 = vcombine.low %v1753, %v1760
    %1763 = vst [vmem:[%s17] sm:$0x3f] %v1761
    // Predicated region
    $region66: #{mini2d_o3_forward.1} parent=1 // pred_check
      _
    $region67: #{mini2d_o3_forward.1} parent=1 // pred_check_branch
      %1765 = sbr.rel (0) target = $region69
    $region68: #{mini2d_o3_forward.1} parent=1 // pred_region
      %s1767 = ssub.s32 32, 32
      %1768 = vsyncadd [#allocation3], %s1767
      %s1770 = sshll.u32 [#allocation2], 4
      %s1771 = int_to_ptr.vmem [resolvable:$true] %s1770
      %1773 = dma.vmem_to_hbm [thread:$0]  %s1771, 32, %s16, [#allocation3]
    $region69: #{mini2d_o3_forward.1} parent=1 // pred_fallthru
      _
    // Predicated region
    $region70: #{mini2d_o3_forward.1} parent=1 // pred_check
      _
    $region71: #{mini2d_o3_forward.1} parent=1 // pred_check_branch
      %1775 = sbr.rel (0) target = $region73
    $region72: #{mini2d_o3_forward.1} parent=1 // pred_region
      _
    $region73: #{mini2d_o3_forward.1} parent=1 // pred_fallthru
      _
    // Predicated region
    $region74: #{mini2d_o3_forward.1} parent=1 // pred_check
      _
    $region75: #{mini2d_o3_forward.1} parent=1 // pred_check_branch
      %1777 = sbr.rel (0) target = $region77
    $region76: #{mini2d_o3_forward.1} parent=1 // pred_region
      %1778 = dma.done [#allocation3], 32
    $region77: #{mini2d_o3_forward.1} parent=1 // pred_fallthru
      _
    // Predicated region
    $region78: #{mini2d_o3_forward.1} parent=1 // pred_check
      _
    $region79: #{mini2d_o3_forward.1} parent=1 // pred_check_branch
      %1780 = sbr.rel (0) target = $region81
    $region80: #{mini2d_o3_forward.1} parent=1 // pred_region
      _
    $region81: #{mini2d_o3_forward.1} parent=1 // pred_fallthru
      _
    %1781 = vsyncpa [#allocation3], 1

</llo_original>
